<compile_context>
chip_gen: v7x
topology: tpu7x:2x2x1
jax: 0.10.0
libtpu: 0.0.40
codegen_flags: <defaults>
</compile_context>

<pallas_src>
import functools
import math

import jax
import jax.numpy as jnp
from jax.experimental import pallas as pl
from jax.experimental.pallas import tpu as pltpu

LN_EPS = 1e-12  # BERT LayerNorm eps

# Row indices inside the packed per-layer (L, 9, H) vector bundle.
BQ, BK, BV, BO, LN1_G, LN1_B, B2, LN2_G, LN2_B = range(9)


def _layernorm(x, gamma, beta):
    # f32 vector math (safe on v5e: no bf16 VPU/EUP there).
    mean = jnp.mean(x, axis=-1, keepdims=True)
    var = jnp.mean((x - mean) ** 2, axis=-1, keepdims=True)
    return (x - mean) * jax.lax.rsqrt(var + LN_EPS) * gamma + beta


# ----------------------------- fused Pallas kernel ---------------------------


def uniter_fused_kernel(img_ref, txt_ref, pos_ref, tok_ref, eg_ref, eb_ref,
                        wq_ref, wk_ref, wv_ref, wo_ref, w1_ref, w2_ref,
                        vec_ref, b1_ref,
                        o_ref,
                        x_sc, q_sc, k_sc, v_sc, ctx_sc,
                        *, num_heads, head_dim, img_len, txt_len, tb):
    """One grid step = (batch block of TB elements, encoder layer).

    Grid is (B//TB, L) with the layer axis innermost ("arbitrary"); the (TB*S, H)
    activation slab lives in the x_sc VMEM scratch across the whole layer sweep and is
    written to HBM only at the last layer.
    """
    layer = pl.program_id(1)
    seq = img_len + txt_len
    hidden = x_sc.shape[-1]

    # ---- layer 0: BERT embeddings (inputs_embeds path) written straight into x_sc ----
    @pl.when(layer == 0)
    def _embed():
        tok = tok_ref[...]                           # (1, H) token-type-0 embedding
        g = eg_ref[...]
        bt = eb_ref[...]
        pos_img = pos_ref[pl.ds(0, img_len), :]      # (img_len, H)
        pos_txt = pos_ref[pl.ds(img_len, txt_len), :]
        for b in range(tb):                          # small static unroll over batch block
            e_img = img_ref[b] + pos_img + tok
            e_txt = txt_ref[b] + pos_txt + tok
            x_sc[pl.ds(b * seq, img_len), :] = _layernorm(e_img, g, bt)
            x_sc[pl.ds(b * seq + img_len, txt_len), :] = _layernorm(e_txt, g, bt)

    def vrow(i):
        # one (1, H) f32 row of the packed per-layer vector bundle
        return vec_ref[0, pl.ds(i, 1), :]

    x = x_sc[...]                                    # (TB*S, H) f32 cross-layer carry
    xb = x.astype(jnp.bfloat16)

    # ---- self-attention: full-width QKV projections over the whole batch block ----
    # (bf16 MXU, f32 accumulation; results parked in bf16 VMEM scratch)
    q_sc[...] = (jnp.dot(xb, wq_ref[0], preferred_element_type=jnp.float32)
                 + vrow(BQ)).astype(jnp.bfloat16)    # 1/sqrt(head_dim) folded into wq/bq
    k_sc[...] = (jnp.dot(xb, wk_ref[0], preferred_element_type=jnp.float32)
                 + vrow(BK)).astype(jnp.bfloat16)
    v_sc[...] = (jnp.dot(xb, wv_ref[0], preferred_element_type=jnp.float32)
                 + vrow(BV)).astype(jnp.bfloat16)

    # per-(batch-element, head) attention; ref-based slices, no transposes, no concats;
    # per-head context is stored lane-contiguously into ctx_sc
    for b in range(tb):
        rows = pl.ds(b * seq, seq)
        for h in range(num_heads):
            cols = pl.ds(h * head_dim, head_dim)
            qh = q_sc[rows, cols]                    # (S, hd) bf16, plain VMEM load
            kh = k_sc[rows, cols]
            vh = v_sc[rows, cols]
            # scores via dot_general contracting last axes (no transpose materialized)
            s = jnp.einsum("qd,kd->qk", qh, kh, preferred_element_type=jnp.float32)
            s = s - jnp.max(s, axis=-1, keepdims=True)       # f32 softmax
            p = jnp.exp(s)
            p = p * pl.reciprocal(jnp.sum(p, axis=-1, keepdims=True), approx=True)
            ctx_sc[rows, cols] = jnp.dot(
                p.astype(jnp.bfloat16), vh,
                preferred_element_type=jnp.float32).astype(jnp.bfloat16)

    # one full-width (K=H) output projection instead of num_heads K=head_dim matmuls
    attn = jnp.dot(ctx_sc[...], wo_ref[0], preferred_element_type=jnp.float32) + vrow(BO)
    h1 = _layernorm(x + attn, vrow(LN1_G), vrow(LN1_B))

    # ---- feed-forward ----
    inter = jnp.dot(h1.astype(jnp.bfloat16), w1_ref[0],
                    preferred_element_type=jnp.float32) + b1_ref[0]
    inter = jax.nn.gelu(inter, approximate=True)  # TODO(synk): erf-GELU to match HF BERT exactly
    ffn = jnp.dot(inter.astype(jnp.bfloat16), w2_ref[0],
                  preferred_element_type=jnp.float32) + vrow(B2)

    out = _layernorm(h1 + ffn, vrow(LN2_G), vrow(LN2_B))
    x_sc[...] = out                                  # carry to next layer

    @pl.when(layer == pl.num_programs(1) - 1)
    def _store():
        o_ref[...] = out.reshape(tb, seq, hidden).astype(o_ref.dtype)


# ----------------------------- pallas_call wrapper ---------------------------


def _pick_tb(batch, cap=4):
    """Batch-block size: ~4 amortizes the weight stream without blowing v7x's 64 MiB VMEM."""
    tb = max(1, min(batch, cap))
    while batch % tb:
        tb -= 1
    return tb


def _vmem_limit_bytes():
    """Generation-specific VMEM budget: ~75% of physical (96 MiB v5e/v6e, 48 MiB v7x)."""
    default_cap = 64 * 1024 * 1024          # conservative: v7x has 64 MiB / TensorCore
    try:
        cap = getattr(pltpu.get_tpu_info(), "vmem_capacity_bytes", None) or default_cap
    except Exception:
        cap = default_cap
    return int(min(cap * 3 // 4, 112 * 1024 * 1024))


def uniter_fusion_forward(img_features, text_features, params, *, num_heads, tb=None):
    B, S_img, H = img_features.shape
    S_txt = text_features.shape[1]
    S = S_img + S_txt
    L = params["wq"].shape[0]
    head_dim = H // num_heads
    if tb is None:
        tb = _pick_tb(B)
    assert B % tb == 0, (B, tb)

    # Pack the nine tiny per-layer (H,)-sized vectors into one streamed (L, 9, H) bundle.
    vec_names = ("bq", "bk", "bv", "bo", "ln1_g", "ln1_b", "b2", "ln2_g", "ln2_b")
    vec_pack = jnp.stack([params[k].reshape(L, H) for k in vec_names], axis=1)

    kernel = functools.partial(uniter_fused_kernel, num_heads=num_heads,
                               head_dim=head_dim, img_len=S_img, txt_len=S_txt, tb=tb)

    def batch_spec(seq):                 # per-batch-block activation tile
        return pl.BlockSpec((tb, seq, H), lambda bb, l: (bb, 0, 0))

    def const_spec(shape):               # whole array resident for every grid step
        return pl.BlockSpec(shape, lambda bb, l: (0,) * len(shape))

    def layer_spec(shape):               # stream layer l's slice along the "arbitrary" axis
        nd = len(shape)
        return pl.BlockSpec((1,) + tuple(shape[1:]),
                            lambda bb, l: (l,) + (0,) * (nd - 1))

    big_weights = [params[k] for k in ("wq", "wk", "wv", "wo", "w1", "w2")]

    in_specs = [
        batch_spec(S_img),               # img_features
        batch_spec(S_txt),               # text_features
        const_spec((S, H)),              # position embeddings (rows 0..S-1)
        const_spec((1, H)),              # token-type-0 embedding
        const_spec((1, H)),              # embedding LN gamma
        const_spec((1, H)),              # embedding LN beta
    ] + [layer_spec(w.shape) for w in big_weights] + [
        layer_spec(vec_pack.shape),      # packed per-layer (9, H) vectors
        layer_spec(params["b1"].shape),  # FFN intermediate bias (L, 1, I)
    ]

    scratch_shapes = [
        pltpu.VMEM((tb * S, H), jnp.float32),    # cross-layer activation carry
        pltpu.VMEM((tb * S, H), jnp.bfloat16),   # q
        pltpu.VMEM((tb * S, H), jnp.bfloat16),   # k
        pltpu.VMEM((tb * S, H), jnp.bfloat16),   # v
        pltpu.VMEM((tb * S, H), jnp.bfloat16),   # per-head context slab
    ]

    return pl.pallas_call(
        kernel,
        out_shape=jax.ShapeDtypeStruct((B, S, H), jnp.float32),
        grid=(B // tb, L),
        in_specs=in_specs,
        out_specs=pl.BlockSpec((tb, S, H), lambda bb, l: (bb, 0, 0)),
        scratch_shapes=scratch_shapes,
        compiler_params=pltpu.CompilerParams(
            # batch-block axis parallel (v7x: 2 TCs); layer axis is the sequential sweep
            dimension_semantics=("parallel", "arbitrary"),
            vmem_limit_bytes=_vmem_limit_bytes(),
        ),
    )(img_features, text_features, params["pos_emb"][:S], params["tok_emb"],
      params["emb_ln_g"], params["emb_ln_b"], *big_weights, vec_pack, params["b1"])


# ----------------------------- parameter init --------------------------------


def init_params(key, hidden, intermediate, num_layers, num_heads,
                max_pos=64, init_std=0.02):
    """Random BERT-encoder params stacked over layers; big matmul weights in bf16,
    biases / LayerNorm params in f32.  The 1/sqrt(head_dim) attention scale is folded
    into wq (and would be folded into bq when loading real, non-zero query biases)."""
    head_dim = hidden // num_heads
    L = num_layers
    keys = jax.random.split(key, 8)
    scale = 1.0 / math.sqrt(head_dim)

    def wf(k, shape):
        return init_std * jax.random.normal(k, shape, jnp.float32)

    params = {
        "pos_emb": wf(keys[0], (max_pos, hidden)),
        "tok_emb": wf(keys[1], (1, hidden)),
        "emb_ln_g": jnp.ones((1, hidden), jnp.float32),
        "emb_ln_b": jnp.zeros((1, hidden), jnp.float32),
        "wq": (wf(keys[2], (L, hidden, hidden)) * scale).astype(jnp.bfloat16),
        "bq": jnp.zeros((L, 1, hidden), jnp.float32),   # real bq must also be pre-scaled
        "wk": wf(keys[3], (L, hidden, hidden)).astype(jnp.bfloat16),
        "bk": jnp.zeros((L, 1, hidden), jnp.float32),
        "wv": wf(keys[4], (L, hidden, hidden)).astype(jnp.bfloat16),
        "bv": jnp.zeros((L, 1, hidden), jnp.float32),
        "wo": wf(keys[5], (L, hidden, hidden)).astype(jnp.bfloat16),
        "bo": jnp.zeros((L, 1, hidden), jnp.float32),
        "ln1_g": jnp.ones((L, 1, hidden), jnp.float32),
        "ln1_b": jnp.zeros((L, 1, hidden), jnp.float32),
        "w1": wf(keys[6], (L, hidden, intermediate)).astype(jnp.bfloat16),
        "b1": jnp.zeros((L, 1, intermediate), jnp.float32),
        "w2": wf(keys[7], (L, intermediate, hidden)).astype(jnp.bfloat16),
        "b2": jnp.zeros((L, 1, hidden), jnp.float32),
        "ln2_g": jnp.ones((L, 1, hidden), jnp.float32),
        "ln2_b": jnp.zeros((L, 1, hidden), jnp.float32),
    }
    return params


# ----------------------------- main -------------------------------------------

if __name__ == "__main__":
    BATCH = 2
    NUM_PATCHES = 8
    TEXT_SEQ = 8
    HIDDEN = 32
    NUM_HEADS = 2
    NUM_LAYERS = 2
    INTERMEDIATE = 64

    key = jax.random.PRNGKey(0)
    k_img, k_txt, k_par = jax.random.split(key, 3)
    img_features = jax.random.normal(k_img, (BATCH, NUM_PATCHES, HIDDEN), jnp.float32)
    text_features = jax.random.normal(k_txt, (BATCH, TEXT_SEQ, HIDDEN), jnp.float32)

    params = init_params(k_par, HIDDEN, INTERMEDIATE, NUM_LAYERS, NUM_HEADS)

    out = uniter_fusion_forward(img_features, text_features, params, num_heads=NUM_HEADS)
    out = jax.block_until_ready(out)

    assert out.shape == (BATCH, NUM_PATCHES + TEXT_SEQ, HIDDEN), out.shape
    assert bool(jnp.all(jnp.isfinite(out)))
    print("KERNEL_OK")
</pallas_src>

<mosaic_0001>
module attributes {stable_mosaic.version = 11 : i64} {
  func.func @uniter_fused_kernel(%arg0: i32, %arg1: i32, %arg2: memref<2x8x32xf32, #tpu.memory_space<vmem>>, %arg3: memref<2x8x32xf32, #tpu.memory_space<vmem>>, %arg4: memref<16x32xf32, #tpu.memory_space<vmem>>, %arg5: memref<1x32xf32, #tpu.memory_space<vmem>>, %arg6: memref<1x32xf32, #tpu.memory_space<vmem>>, %arg7: memref<1x32xf32, #tpu.memory_space<vmem>>, %arg8: memref<1x32x32xbf16, #tpu.memory_space<vmem>>, %arg9: memref<1x32x32xbf16, #tpu.memory_space<vmem>>, %arg10: memref<1x32x32xbf16, #tpu.memory_space<vmem>>, %arg11: memref<1x32x32xbf16, #tpu.memory_space<vmem>>, %arg12: memref<1x32x64xbf16, #tpu.memory_space<vmem>>, %arg13: memref<1x64x32xbf16, #tpu.memory_space<vmem>>, %arg14: memref<1x9x32xf32, #tpu.memory_space<vmem>>, %arg15: memref<1x1x64xf32, #tpu.memory_space<vmem>>, %arg16: memref<2x16x32xf32, #tpu.memory_space<vmem>>, %arg17: memref<32x32xf32, #tpu.memory_space<vmem>>, %arg18: memref<32x32xbf16, #tpu.memory_space<vmem>>, %arg19: memref<32x32xbf16, #tpu.memory_space<vmem>>, %arg20: memref<32x32xbf16, #tpu.memory_space<vmem>>, %arg21: memref<32x32xbf16, #tpu.memory_space<vmem>>) attributes {dimension_semantics = [#tpu.dimension_semantics<parallel>, #tpu.dimension_semantics<arbitrary>], iteration_bounds = array<i64: 1, 2>, scalar_prefetch = 0 : i64, scratch_operands = 5 : i64, tpu.core_type = #tpu.core_type<tc>, window_params = [{transform_indices = @transform_0, window_bounds = array<i64: 2, 8, 32>}, {transform_indices = @transform_1, window_bounds = array<i64: 2, 8, 32>}, {pipeline_mode = #tpu.pipeline_mode<synchronous>, transform_indices = @transform_2, window_bounds = array<i64: 16, 32>}, {pipeline_mode = #tpu.pipeline_mode<synchronous>, transform_indices = @transform_3, window_bounds = array<i64: 1, 32>}, {pipeline_mode = #tpu.pipeline_mode<synchronous>, transform_indices = @transform_4, window_bounds = array<i64: 1, 32>}, {pipeline_mode = #tpu.pipeline_mode<synchronous>, transform_indices = @transform_5, window_bounds = array<i64: 1, 32>}, {transform_indices = @transform_6, window_bounds = array<i64: 1, 32, 32>}, {transform_indices = @transform_7, window_bounds = array<i64: 1, 32, 32>}, {transform_indices = @transform_8, window_bounds = array<i64: 1, 32, 32>}, {transform_indices = @transform_9, window_bounds = array<i64: 1, 32, 32>}, {transform_indices = @transform_10, window_bounds = array<i64: 1, 32, 64>}, {transform_indices = @transform_11, window_bounds = array<i64: 1, 64, 32>}, {transform_indices = @transform_12, window_bounds = array<i64: 1, 9, 32>}, {transform_indices = @transform_13, window_bounds = array<i64: 1, 1, 64>}, {transform_indices = @transform_14, window_bounds = array<i64: 2, 16, 32>}]} {
    %c0_i32 = arith.constant 0 : i32
    %0 = arith.cmpi eq, %arg1, %c0_i32 : i32
    %1 = arith.extui %0 : i1 to i32
    %c0_i32_0 = arith.constant 0 : i32
    %2 = arith.cmpi ne, %1, %c0_i32_0 : i32
    scf.if %2 {
      %c0_119 = arith.constant 0 : index
      %c0_120 = arith.constant 0 : index
      %199 = vector.load %arg5[%c0_119, %c0_120] : memref<1x32xf32, #tpu.memory_space<vmem>>, vector<1x32xf32>
      %c0_121 = arith.constant 0 : index
      %c0_122 = arith.constant 0 : index
      %200 = vector.load %arg6[%c0_121, %c0_122] : memref<1x32xf32, #tpu.memory_space<vmem>>, vector<1x32xf32>
      %c0_123 = arith.constant 0 : index
      %c0_124 = arith.constant 0 : index
      %201 = vector.load %arg7[%c0_123, %c0_124] : memref<1x32xf32, #tpu.memory_space<vmem>>, vector<1x32xf32>
      %c0_125 = arith.constant 0 : index
      %c0_126 = arith.constant 0 : index
      %202 = vector.load %arg4[%c0_125, %c0_126] : memref<16x32xf32, #tpu.memory_space<vmem>>, vector<8x32xf32>
      %c8_127 = arith.constant 8 : index
      %c0_128 = arith.constant 0 : index
      %203 = vector.load %arg4[%c8_127, %c0_128] : memref<16x32xf32, #tpu.memory_space<vmem>>, vector<8x32xf32>
      %c0_129 = arith.constant 0 : index
      %c0_130 = arith.constant 0 : index
      %c0_131 = arith.constant 0 : index
      %204 = vector.load %arg2[%c0_129, %c0_130, %c0_131] : memref<2x8x32xf32, #tpu.memory_space<vmem>>, vector<1x8x32xf32>
      %205 = vector.shape_cast %204 : vector<1x8x32xf32> to vector<8x32xf32>
      %206 = arith.addf %205, %202 : vector<8x32xf32>
      %207 = vector.broadcast %199 : vector<1x32xf32> to vector<8x32xf32>
      %208 = arith.addf %206, %207 : vector<8x32xf32>
      %c0_132 = arith.constant 0 : index
      %c0_133 = arith.constant 0 : index
      %c0_134 = arith.constant 0 : index
      %209 = vector.load %arg3[%c0_132, %c0_133, %c0_134] : memref<2x8x32xf32, #tpu.memory_space<vmem>>, vector<1x8x32xf32>
      %210 = vector.shape_cast %209 : vector<1x8x32xf32> to vector<8x32xf32>
      %211 = arith.addf %210, %203 : vector<8x32xf32>
      %212 = vector.broadcast %199 : vector<1x32xf32> to vector<8x32xf32>
      %213 = arith.addf %211, %212 : vector<8x32xf32>
      %cst_135 = arith.constant dense<0.000000e+00> : vector<8xf32>
      %214 = vector.multi_reduction <add>, %208, %cst_135 [1] : vector<8x32xf32> to vector<8xf32>
      %215 = vector.shape_cast %214 : vector<8xf32> to vector<8x1xf32>
      %cst_136 = arith.constant 3.200000e+01 : f32
      %216 = vector.broadcast %cst_136 : f32 to vector<8x1xf32>
      %217 = arith.divf %215, %216 : vector<8x1xf32>
      %218 = vector.broadcast %217 : vector<8x1xf32> to vector<8x32xf32>
      %219 = arith.subf %208, %218 : vector<8x32xf32>
      %220 = arith.mulf %219, %219 : vector<8x32xf32>
      %cst_137 = arith.constant dense<0.000000e+00> : vector<8xf32>
      %221 = vector.multi_reduction <add>, %220, %cst_137 [1] : vector<8x32xf32> to vector<8xf32>
      %222 = vector.shape_cast %221 : vector<8xf32> to vector<8x1xf32>
      %cst_138 = arith.constant 3.200000e+01 : f32
      %223 = vector.broadcast %cst_138 : f32 to vector<8x1xf32>
      %224 = arith.divf %222, %223 : vector<8x1xf32>
      %225 = vector.broadcast %217 : vector<8x1xf32> to vector<8x32xf32>
      %226 = arith.subf %208, %225 : vector<8x32xf32>
      %cst_139 = arith.constant 9.99999996E-13 : f32
      %227 = vector.broadcast %cst_139 : f32 to vector<8x1xf32>
      %228 = arith.addf %224, %227 : vector<8x1xf32>
      %229 = math.rsqrt %228 : vector<8x1xf32>
      %230 = vector.broadcast %229 : vector<8x1xf32> to vector<8x32xf32>
      %231 = arith.mulf %226, %230 : vector<8x32xf32>
      %232 = vector.broadcast %200 : vector<1x32xf32> to vector<8x32xf32>
      %233 = arith.mulf %231, %232 : vector<8x32xf32>
      %234 = vector.broadcast %201 : vector<1x32xf32> to vector<8x32xf32>
      %235 = arith.addf %233, %234 : vector<8x32xf32>
      %c0_140 = arith.constant 0 : index
      %c0_141 = arith.constant 0 : index
      %236 = vector.load %arg17[%c0_140, %c0_141] : memref<32x32xf32, #tpu.memory_space<vmem>>, vector<8x32xf32>
      tpu.vector_store %arg17[%c0_140, %c0_141], %235 {strides = array<i32>} : memref<32x32xf32, #tpu.memory_space<vmem>>, vector<8x32xf32>,
      %cst_142 = arith.constant dense<0.000000e+00> : vector<8xf32>
      %237 = vector.multi_reduction <add>, %213, %cst_142 [1] : vector<8x32xf32> to vector<8xf32>
      %238 = vector.shape_cast %237 : vector<8xf32> to vector<8x1xf32>
      %cst_143 = arith.constant 3.200000e+01 : f32
      %239 = vector.broadcast %cst_143 : f32 to vector<8x1xf32>
      %240 = arith.divf %238, %239 : vector<8x1xf32>
      %241 = vector.broadcast %240 : vector<8x1xf32> to vector<8x32xf32>
      %242 = arith.subf %213, %241 : vector<8x32xf32>
      %243 = arith.mulf %242, %242 : vector<8x32xf32>
      %cst_144 = arith.constant dense<0.000000e+00> : vector<8xf32>
      %244 = vector.multi_reduction <add>, %243, %cst_144 [1] : vector<8x32xf32> to vector<8xf32>
      %245 = vector.shape_cast %244 : vector<8xf32> to vector<8x1xf32>
      %cst_145 = arith.constant 3.200000e+01 : f32
      %246 = vector.broadcast %cst_145 : f32 to vector<8x1xf32>
      %247 = arith.divf %245, %246 : vector<8x1xf32>
      %248 = vector.broadcast %240 : vector<8x1xf32> to vector<8x32xf32>
      %249 = arith.subf %213, %248 : vector<8x32xf32>
      %cst_146 = arith.constant 9.99999996E-13 : f32
      %250 = vector.broadcast %cst_146 : f32 to vector<8x1xf32>
      %251 = arith.addf %247, %250 : vector<8x1xf32>
      %252 = math.rsqrt %251 : vector<8x1xf32>
      %253 = vector.broadcast %252 : vector<8x1xf32> to vector<8x32xf32>
      %254 = arith.mulf %249, %253 : vector<8x32xf32>
      %255 = vector.broadcast %200 : vector<1x32xf32> to vector<8x32xf32>
      %256 = arith.mulf %254, %255 : vector<8x32xf32>
      %257 = vector.broadcast %201 : vector<1x32xf32> to vector<8x32xf32>
      %258 = arith.addf %256, %257 : vector<8x32xf32>
      %c8_147 = arith.constant 8 : index
      %c0_148 = arith.constant 0 : index
      %259 = vector.load %arg17[%c8_147, %c0_148] : memref<32x32xf32, #tpu.memory_space<vmem>>, vector<8x32xf32>
      tpu.vector_store %arg17[%c8_147, %c0_148], %258 {strides = array<i32>} : memref<32x32xf32, #tpu.memory_space<vmem>>, vector<8x32xf32>,
      %c1_149 = arith.constant 1 : index
      %c0_150 = arith.constant 0 : index
      %c0_151 = arith.constant 0 : index
      %260 = vector.load %arg2[%c1_149, %c0_150, %c0_151] : memref<2x8x32xf32, #tpu.memory_space<vmem>>, vector<1x8x32xf32>
      %261 = vector.shape_cast %260 : vector<1x8x32xf32> to vector<8x32xf32>
      %262 = arith.addf %261, %202 : vector<8x32xf32>
      %263 = vector.broadcast %199 : vector<1x32xf32> to vector<8x32xf32>
      %264 = arith.addf %262, %263 : vector<8x32xf32>
      %c1_152 = arith.constant 1 : index
      %c0_153 = arith.constant 0 : index
      %c0_154 = arith.constant 0 : index
      %265 = vector.load %arg3[%c1_152, %c0_153, %c0_154] : memref<2x8x32xf32, #tpu.memory_space<vmem>>, vector<1x8x32xf32>
      %266 = vector.shape_cast %265 : vector<1x8x32xf32> to vector<8x32xf32>
      %267 = arith.addf %266, %203 : vector<8x32xf32>
      %268 = vector.broadcast %199 : vector<1x32xf32> to vector<8x32xf32>
      %269 = arith.addf %267, %268 : vector<8x32xf32>
      %cst_155 = arith.constant dense<0.000000e+00> : vector<8xf32>
      %270 = vector.multi_reduction <add>, %264, %cst_155 [1] : vector<8x32xf32> to vector<8xf32>
      %271 = vector.shape_cast %270 : vector<8xf32> to vector<8x1xf32>
      %cst_156 = arith.constant 3.200000e+01 : f32
      %272 = vector.broadcast %cst_156 : f32 to vector<8x1xf32>
      %273 = arith.divf %271, %272 : vector<8x1xf32>
      %274 = vector.broadcast %273 : vector<8x1xf32> to vector<8x32xf32>
      %275 = arith.subf %264, %274 : vector<8x32xf32>
      %276 = arith.mulf %275, %275 : vector<8x32xf32>
      %cst_157 = arith.constant dense<0.000000e+00> : vector<8xf32>
      %277 = vector.multi_reduction <add>, %276, %cst_157 [1] : vector<8x32xf32> to vector<8xf32>
      %278 = vector.shape_cast %277 : vector<8xf32> to vector<8x1xf32>
      %cst_158 = arith.constant 3.200000e+01 : f32
      %279 = vector.broadcast %cst_158 : f32 to vector<8x1xf32>
      %280 = arith.divf %278, %279 : vector<8x1xf32>
      %281 = vector.broadcast %273 : vector<8x1xf32> to vector<8x32xf32>
      %282 = arith.subf %264, %281 : vector<8x32xf32>
      %cst_159 = arith.constant 9.99999996E-13 : f32
      %283 = vector.broadcast %cst_159 : f32 to vector<8x1xf32>
      %284 = arith.addf %280, %283 : vector<8x1xf32>
      %285 = math.rsqrt %284 : vector<8x1xf32>
      %286 = vector.broadcast %285 : vector<8x1xf32> to vector<8x32xf32>
      %287 = arith.mulf %282, %286 : vector<8x32xf32>
      %288 = vector.broadcast %200 : vector<1x32xf32> to vector<8x32xf32>
      %289 = arith.mulf %287, %288 : vector<8x32xf32>
      %290 = vector.broadcast %201 : vector<1x32xf32> to vector<8x32xf32>
      %291 = arith.addf %289, %290 : vector<8x32xf32>
      %c16_160 = arith.constant 16 : index
      %c0_161 = arith.constant 0 : index
      %292 = vector.load %arg17[%c16_160, %c0_161] : memref<32x32xf32, #tpu.memory_space<vmem>>, vector<8x32xf32>
      tpu.vector_store %arg17[%c16_160, %c0_161], %291 {strides = array<i32>} : memref<32x32xf32, #tpu.memory_space<vmem>>, vector<8x32xf32>,
      %cst_162 = arith.constant dense<0.000000e+00> : vector<8xf32>
      %293 = vector.multi_reduction <add>, %269, %cst_162 [1] : vector<8x32xf32> to vector<8xf32>
      %294 = vector.shape_cast %293 : vector<8xf32> to vector<8x1xf32>
      %cst_163 = arith.constant 3.200000e+01 : f32
      %295 = vector.broadcast %cst_163 : f32 to vector<8x1xf32>
      %296 = arith.divf %294, %295 : vector<8x1xf32>
      %297 = vector.broadcast %296 : vector<8x1xf32> to vector<8x32xf32>
      %298 = arith.subf %269, %297 : vector<8x32xf32>
      %299 = arith.mulf %298, %298 : vector<8x32xf32>
      %cst_164 = arith.constant dense<0.000000e+00> : vector<8xf32>
      %300 = vector.multi_reduction <add>, %299, %cst_164 [1] : vector<8x32xf32> to vector<8xf32>
      %301 = vector.shape_cast %300 : vector<8xf32> to vector<8x1xf32>
      %cst_165 = arith.constant 3.200000e+01 : f32
      %302 = vector.broadcast %cst_165 : f32 to vector<8x1xf32>
      %303 = arith.divf %301, %302 : vector<8x1xf32>
      %304 = vector.broadcast %296 : vector<8x1xf32> to vector<8x32xf32>
      %305 = arith.subf %269, %304 : vector<8x32xf32>
      %cst_166 = arith.constant 9.99999996E-13 : f32
      %306 = vector.broadcast %cst_166 : f32 to vector<8x1xf32>
      %307 = arith.addf %303, %306 : vector<8x1xf32>
      %308 = math.rsqrt %307 : vector<8x1xf32>
      %309 = vector.broadcast %308 : vector<8x1xf32> to vector<8x32xf32>
      %310 = arith.mulf %305, %309 : vector<8x32xf32>
      %311 = vector.broadcast %200 : vector<1x32xf32> to vector<8x32xf32>
      %312 = arith.mulf %310, %311 : vector<8x32xf32>
      %313 = vector.broadcast %201 : vector<1x32xf32> to vector<8x32xf32>
      %314 = arith.addf %312, %313 : vector<8x32xf32>
      %c24 = arith.constant 24 : index
      %c0_167 = arith.constant 0 : index
      %315 = vector.load %arg17[%c24, %c0_167] : memref<32x32xf32, #tpu.memory_space<vmem>>, vector<8x32xf32>
      tpu.vector_store %arg17[%c24, %c0_167], %314 {strides = array<i32>} : memref<32x32xf32, #tpu.memory_space<vmem>>, vector<8x32xf32>,
    } else {
    }
    %c0 = arith.constant 0 : index
    %c0_1 = arith.constant 0 : index
    %3 = vector.load %arg17[%c0, %c0_1] : memref<32x32xf32, #tpu.memory_space<vmem>>, vector<32x32xf32>
    %4 = arith.truncf %3 : vector<32x32xf32> to vector<32x32xbf16>
    %c0_2 = arith.constant 0 : index
    %c0_3 = arith.constant 0 : index
    %c0_4 = arith.constant 0 : index
    %5 = vector.load %arg8[%c0_2, %c0_3, %c0_4] : memref<1x32x32xbf16, #tpu.memory_space<vmem>>, vector<1x32x32xbf16>
    %6 = vector.shape_cast %5 : vector<1x32x32xbf16> to vector<32x32xbf16>
    %cst = arith.constant dense<0.000000e+00> : vector<32x32xf32>
    %7 = tpu.matmul %4, %6, %cst {dimension_numbers = #tpu.dot_dimension_numbers<[1], [0], [0], [1], [0, 0, 1, 1], [], []>} : vector<32x32xbf16>, vector<32x32xbf16>, vector<32x32xf32> -> vector<32x32xf32>
    %c0_5 = arith.constant 0 : index
    %c0_6 = arith.constant 0 : index
    %c0_7 = arith.constant 0 : index
    %8 = vector.load %arg14[%c0_5, %c0_6, %c0_7] : memref<1x9x32xf32, #tpu.memory_space<vmem>>, vector<1x1x32xf32>
    %9 = vector.shape_cast %8 : vector<1x1x32xf32> to vector<1x32xf32>
    %10 = vector.broadcast %9 : vector<1x32xf32> to vector<32x32xf32>
    %11 = arith.addf %7, %10 : vector<32x32xf32>
    %12 = arith.truncf %11 : vector<32x32xf32> to vector<32x32xbf16>
    %c0_8 = arith.constant 0 : index
    %c0_9 = arith.constant 0 : index
    %13 = vector.load %arg18[%c0_8, %c0_9] : memref<32x32xbf16, #tpu.memory_space<vmem>>, vector<32x32xbf16>
    tpu.vector_store %arg18[%c0_8, %c0_9], %12 {strides = array<i32>} : memref<32x32xbf16, #tpu.memory_space<vmem>>, vector<32x32xbf16>,
    %c0_10 = arith.constant 0 : index
    %c0_11 = arith.constant 0 : index
    %c0_12 = arith.constant 0 : index
    %14 = vector.load %arg9[%c0_10, %c0_11, %c0_12] : memref<1x32x32xbf16, #tpu.memory_space<vmem>>, vector<1x32x32xbf16>
    %15 = vector.shape_cast %14 : vector<1x32x32xbf16> to vector<32x32xbf16>
    %cst_13 = arith.constant dense<0.000000e+00> : vector<32x32xf32>
    %16 = tpu.matmul %4, %15, %cst_13 {dimension_numbers = #tpu.dot_dimension_numbers<[1], [0], [0], [1], [0, 0, 1, 1], [], []>} : vector<32x32xbf16>, vector<32x32xbf16>, vector<32x32xf32> -> vector<32x32xf32>
    %c0_14 = arith.constant 0 : index
    %c1 = arith.constant 1 : index
    %c0_15 = arith.constant 0 : index
    %17 = vector.load %arg14[%c0_14, %c1, %c0_15] : memref<1x9x32xf32, #tpu.memory_space<vmem>>, vector<1x1x32xf32>
    %18 = vector.shape_cast %17 : vector<1x1x32xf32> to vector<1x32xf32>
    %19 = vector.broadcast %18 : vector<1x32xf32> to vector<32x32xf32>
    %20 = arith.addf %16, %19 : vector<32x32xf32>
    %21 = arith.truncf %20 : vector<32x32xf32> to vector<32x32xbf16>
    %c0_16 = arith.constant 0 : index
    %c0_17 = arith.constant 0 : index
    %22 = vector.load %arg19[%c0_16, %c0_17] : memref<32x32xbf16, #tpu.memory_space<vmem>>, vector<32x32xbf16>
    tpu.vector_store %arg19[%c0_16, %c0_17], %21 {strides = array<i32>} : memref<32x32xbf16, #tpu.memory_space<vmem>>, vector<32x32xbf16>,
    %c0_18 = arith.constant 0 : index
    %c0_19 = arith.constant 0 : index
    %c0_20 = arith.constant 0 : index
    %23 = vector.load %arg10[%c0_18, %c0_19, %c0_20] : memref<1x32x32xbf16, #tpu.memory_space<vmem>>, vector<1x32x32xbf16>
    %24 = vector.shape_cast %23 : vector<1x32x32xbf16> to vector<32x32xbf16>
    %cst_21 = arith.constant dense<0.000000e+00> : vector<32x32xf32>
    %25 = tpu.matmul %4, %24, %cst_21 {dimension_numbers = #tpu.dot_dimension_numbers<[1], [0], [0], [1], [0, 0, 1, 1], [], []>} : vector<32x32xbf16>, vector<32x32xbf16>, vector<32x32xf32> -> vector<32x32xf32>
    %c0_22 = arith.constant 0 : index
    %c2 = arith.constant 2 : index
    %c0_23 = arith.constant 0 : index
    %26 = vector.load %arg14[%c0_22, %c2, %c0_23] : memref<1x9x32xf32, #tpu.memory_space<vmem>>, vector<1x1x32xf32>
    %27 = vector.shape_cast %26 : vector<1x1x32xf32> to vector<1x32xf32>
    %28 = vector.broadcast %27 : vector<1x32xf32> to vector<32x32xf32>
    %29 = arith.addf %25, %28 : vector<32x32xf32>
    %30 = arith.truncf %29 : vector<32x32xf32> to vector<32x32xbf16>
    %c0_24 = arith.constant 0 : index
    %c0_25 = arith.constant 0 : index
    %31 = vector.load %arg20[%c0_24, %c0_25] : memref<32x32xbf16, #tpu.memory_space<vmem>>, vector<32x32xbf16>
    tpu.vector_store %arg20[%c0_24, %c0_25], %30 {strides = array<i32>} : memref<32x32xbf16, #tpu.memory_space<vmem>>, vector<32x32xbf16>,
    %c0_26 = arith.constant 0 : index
    %c0_27 = arith.constant 0 : index
    %32 = vector.load %arg18[%c0_26, %c0_27] : memref<32x32xbf16, #tpu.memory_space<vmem>>, vector<16x16xbf16>
    %c0_28 = arith.constant 0 : index
    %c0_29 = arith.constant 0 : index
    %33 = vector.load %arg19[%c0_28, %c0_29] : memref<32x32xbf16, #tpu.memory_space<vmem>>, vector<16x16xbf16>
    %c0_30 = arith.constant 0 : index
    %c0_31 = arith.constant 0 : index
    %34 = vector.load %arg20[%c0_30, %c0_31] : memref<32x32xbf16, #tpu.memory_space<vmem>>, vector<16x16xbf16>
    "tpu.trace_start"() <{level = 10 : i32, message = "qd,kd->qk"}> : () -> ()
    %cst_32 = arith.constant dense<0.000000e+00> : vector<16x16xf32>
    %35 = tpu.matmul %32, %33, %cst_32 {dimension_numbers = #tpu.dot_dimension_numbers<[1], [1], [0], [0], [0, 0, 1, 0], [], []>} : vector<16x16xbf16>, vector<16x16xbf16>, vector<16x16xf32> -> vector<16x16xf32>
    "tpu.trace_stop"() : () -> ()
    %cst_33 = arith.constant dense<0xFF800000> : vector<16xf32>
    %36 = vector.multi_reduction <maximumf>, %35, %cst_33 [1] : vector<16x16xf32> to vector<16xf32>
    %37 = vector.shape_cast %36 : vector<16xf32> to vector<16x1xf32>
    %38 = vector.broadcast %37 : vector<16x1xf32> to vector<16x16xf32>
    %39 = arith.subf %35, %38 : vector<16x16xf32>
    %40 = math.exp %39 : vector<16x16xf32>
    %cst_34 = arith.constant dense<0.000000e+00> : vector<16xf32>
    %41 = vector.multi_reduction <add>, %40, %cst_34 [1] : vector<16x16xf32> to vector<16xf32>
    %42 = vector.shape_cast %41 : vector<16xf32> to vector<16x1xf32>
    %43 = tpu.reciprocal %42 {approx = true} : vector<16x1xf32> -> vector<16x1xf32>
    %44 = vector.broadcast %43 : vector<16x1xf32> to vector<16x16xf32>
    %45 = arith.mulf %40, %44 : vector<16x16xf32>
    %46 = arith.truncf %45 : vector<16x16xf32> to vector<16x16xbf16>
    %cst_35 = arith.constant dense<0.000000e+00> : vector<16x16xf32>
    %47 = tpu.matmul %46, %34, %cst_35 {dimension_numbers = #tpu.dot_dimension_numbers<[1], [0], [0], [1], [0, 0, 1, 1], [], []>} : vector<16x16xbf16>, vector<16x16xbf16>, vector<16x16xf32> -> vector<16x16xf32>
    %48 = arith.truncf %47 : vector<16x16xf32> to vector<16x16xbf16>
    %c0_36 = arith.constant 0 : index
    %c0_37 = arith.constant 0 : index
    %49 = vector.load %arg21[%c0_36, %c0_37] : memref<32x32xbf16, #tpu.memory_space<vmem>>, vector<16x16xbf16>
    tpu.vector_store %arg21[%c0_36, %c0_37], %48 {strides = array<i32>} : memref<32x32xbf16, #tpu.memory_space<vmem>>, vector<16x16xbf16>,
    %c0_38 = arith.constant 0 : index
    %c16 = arith.constant 16 : index
    %50 = vector.load %arg18[%c0_38, %c16] : memref<32x32xbf16, #tpu.memory_space<vmem>>, vector<16x16xbf16>
    %c0_39 = arith.constant 0 : index
    %c16_40 = arith.constant 16 : index
    %51 = vector.load %arg19[%c0_39, %c16_40] : memref<32x32xbf16, #tpu.memory_space<vmem>>, vector<16x16xbf16>
    %c0_41 = arith.constant 0 : index
    %c16_42 = arith.constant 16 : index
    %52 = vector.load %arg20[%c0_41, %c16_42] : memref<32x32xbf16, #tpu.memory_space<vmem>>, vector<16x16xbf16>
    "tpu.trace_start"() <{level = 10 : i32, message = "qd,kd->qk"}> : () -> ()
    %cst_43 = arith.constant dense<0.000000e+00> : vector<16x16xf32>
    %53 = tpu.matmul %50, %51, %cst_43 {dimension_numbers = #tpu.dot_dimension_numbers<[1], [1], [0], [0], [0, 0, 1, 0], [], []>} : vector<16x16xbf16>, vector<16x16xbf16>, vector<16x16xf32> -> vector<16x16xf32>
    "tpu.trace_stop"() : () -> ()
    %cst_44 = arith.constant dense<0xFF800000> : vector<16xf32>
    %54 = vector.multi_reduction <maximumf>, %53, %cst_44 [1] : vector<16x16xf32> to vector<16xf32>
    %55 = vector.shape_cast %54 : vector<16xf32> to vector<16x1xf32>
    %56 = vector.broadcast %55 : vector<16x1xf32> to vector<16x16xf32>
    %57 = arith.subf %53, %56 : vector<16x16xf32>
    %58 = math.exp %57 : vector<16x16xf32>
    %cst_45 = arith.constant dense<0.000000e+00> : vector<16xf32>
    %59 = vector.multi_reduction <add>, %58, %cst_45 [1] : vector<16x16xf32> to vector<16xf32>
    %60 = vector.shape_cast %59 : vector<16xf32> to vector<16x1xf32>
    %61 = tpu.reciprocal %60 {approx = true} : vector<16x1xf32> -> vector<16x1xf32>
    %62 = vector.broadcast %61 : vector<16x1xf32> to vector<16x16xf32>
    %63 = arith.mulf %58, %62 : vector<16x16xf32>
    %64 = arith.truncf %63 : vector<16x16xf32> to vector<16x16xbf16>
    %cst_46 = arith.constant dense<0.000000e+00> : vector<16x16xf32>
    %65 = tpu.matmul %64, %52, %cst_46 {dimension_numbers = #tpu.dot_dimension_numbers<[1], [0], [0], [1], [0, 0, 1, 1], [], []>} : vector<16x16xbf16>, vector<16x16xbf16>, vector<16x16xf32> -> vector<16x16xf32>
    %66 = arith.truncf %65 : vector<16x16xf32> to vector<16x16xbf16>
    %c0_47 = arith.constant 0 : index
    %c16_48 = arith.constant 16 : index
    %67 = vector.load %arg21[%c0_47, %c16_48] : memref<32x32xbf16, #tpu.memory_space<vmem>>, vector<16x16xbf16>
    tpu.vector_store %arg21[%c0_47, %c16_48], %66 {strides = array<i32>} : memref<32x32xbf16, #tpu.memory_space<vmem>>, vector<16x16xbf16>,
    %c16_49 = arith.constant 16 : index
    %c0_50 = arith.constant 0 : index
    %68 = vector.load %arg18[%c16_49, %c0_50] : memref<32x32xbf16, #tpu.memory_space<vmem>>, vector<16x16xbf16>
    %c16_51 = arith.constant 16 : index
    %c0_52 = arith.constant 0 : index
    %69 = vector.load %arg19[%c16_51, %c0_52] : memref<32x32xbf16, #tpu.memory_space<vmem>>, vector<16x16xbf16>
    %c16_53 = arith.constant 16 : index
    %c0_54 = arith.constant 0 : index
    %70 = vector.load %arg20[%c16_53, %c0_54] : memref<32x32xbf16, #tpu.memory_space<vmem>>, vector<16x16xbf16>
    "tpu.trace_start"() <{level = 10 : i32, message = "qd,kd->qk"}> : () -> ()
    %cst_55 = arith.constant dense<0.000000e+00> : vector<16x16xf32>
    %71 = tpu.matmul %68, %69, %cst_55 {dimension_numbers = #tpu.dot_dimension_numbers<[1], [1], [0], [0], [0, 0, 1, 0], [], []>} : vector<16x16xbf16>, vector<16x16xbf16>, vector<16x16xf32> -> vector<16x16xf32>
    "tpu.trace_stop"() : () -> ()
    %cst_56 = arith.constant dense<0xFF800000> : vector<16xf32>
    %72 = vector.multi_reduction <maximumf>, %71, %cst_56 [1] : vector<16x16xf32> to vector<16xf32>
    %73 = vector.shape_cast %72 : vector<16xf32> to vector<16x1xf32>
    %74 = vector.broadcast %73 : vector<16x1xf32> to vector<16x16xf32>
    %75 = arith.subf %71, %74 : vector<16x16xf32>
    %76 = math.exp %75 : vector<16x16xf32>
    %cst_57 = arith.constant dense<0.000000e+00> : vector<16xf32>
    %77 = vector.multi_reduction <add>, %76, %cst_57 [1] : vector<16x16xf32> to vector<16xf32>
    %78 = vector.shape_cast %77 : vector<16xf32> to vector<16x1xf32>
    %79 = tpu.reciprocal %78 {approx = true} : vector<16x1xf32> -> vector<16x1xf32>
    %80 = vector.broadcast %79 : vector<16x1xf32> to vector<16x16xf32>
    %81 = arith.mulf %76, %80 : vector<16x16xf32>
    %82 = arith.truncf %81 : vector<16x16xf32> to vector<16x16xbf16>
    %cst_58 = arith.constant dense<0.000000e+00> : vector<16x16xf32>
    %83 = tpu.matmul %82, %70, %cst_58 {dimension_numbers = #tpu.dot_dimension_numbers<[1], [0], [0], [1], [0, 0, 1, 1], [], []>} : vector<16x16xbf16>, vector<16x16xbf16>, vector<16x16xf32> -> vector<16x16xf32>
    %84 = arith.truncf %83 : vector<16x16xf32> to vector<16x16xbf16>
    %c16_59 = arith.constant 16 : index
    %c0_60 = arith.constant 0 : index
    %85 = vector.load %arg21[%c16_59, %c0_60] : memref<32x32xbf16, #tpu.memory_space<vmem>>, vector<16x16xbf16>
    tpu.vector_store %arg21[%c16_59, %c0_60], %84 {strides = array<i32>} : memref<32x32xbf16, #tpu.memory_space<vmem>>, vector<16x16xbf16>,
    %c16_61 = arith.constant 16 : index
    %c16_62 = arith.constant 16 : index
    %86 = vector.load %arg18[%c16_61, %c16_62] : memref<32x32xbf16, #tpu.memory_space<vmem>>, vector<16x16xbf16>
    %c16_63 = arith.constant 16 : index
    %c16_64 = arith.constant 16 : index
    %87 = vector.load %arg19[%c16_63, %c16_64] : memref<32x32xbf16, #tpu.memory_space<vmem>>, vector<16x16xbf16>
    %c16_65 = arith.constant 16 : index
    %c16_66 = arith.constant 16 : index
    %88 = vector.load %arg20[%c16_65, %c16_66] : memref<32x32xbf16, #tpu.memory_space<vmem>>, vector<16x16xbf16>
    "tpu.trace_start"() <{level = 10 : i32, message = "qd,kd->qk"}> : () -> ()
    %cst_67 = arith.constant dense<0.000000e+00> : vector<16x16xf32>
    %89 = tpu.matmul %86, %87, %cst_67 {dimension_numbers = #tpu.dot_dimension_numbers<[1], [1], [0], [0], [0, 0, 1, 0], [], []>} : vector<16x16xbf16>, vector<16x16xbf16>, vector<16x16xf32> -> vector<16x16xf32>
    "tpu.trace_stop"() : () -> ()
    %cst_68 = arith.constant dense<0xFF800000> : vector<16xf32>
    %90 = vector.multi_reduction <maximumf>, %89, %cst_68 [1] : vector<16x16xf32> to vector<16xf32>
    %91 = vector.shape_cast %90 : vector<16xf32> to vector<16x1xf32>
    %92 = vector.broadcast %91 : vector<16x1xf32> to vector<16x16xf32>
    %93 = arith.subf %89, %92 : vector<16x16xf32>
    %94 = math.exp %93 : vector<16x16xf32>
    %cst_69 = arith.constant dense<0.000000e+00> : vector<16xf32>
    %95 = vector.multi_reduction <add>, %94, %cst_69 [1] : vector<16x16xf32> to vector<16xf32>
    %96 = vector.shape_cast %95 : vector<16xf32> to vector<16x1xf32>
    %97 = tpu.reciprocal %96 {approx = true} : vector<16x1xf32> -> vector<16x1xf32>
    %98 = vector.broadcast %97 : vector<16x1xf32> to vector<16x16xf32>
    %99 = arith.mulf %94, %98 : vector<16x16xf32>
    %100 = arith.truncf %99 : vector<16x16xf32> to vector<16x16xbf16>
    %cst_70 = arith.constant dense<0.000000e+00> : vector<16x16xf32>
    %101 = tpu.matmul %100, %88, %cst_70 {dimension_numbers = #tpu.dot_dimension_numbers<[1], [0], [0], [1], [0, 0, 1, 1], [], []>} : vector<16x16xbf16>, vector<16x16xbf16>, vector<16x16xf32> -> vector<16x16xf32>
    %102 = arith.truncf %101 : vector<16x16xf32> to vector<16x16xbf16>
    %c16_71 = arith.constant 16 : index
    %c16_72 = arith.constant 16 : index
    %103 = vector.load %arg21[%c16_71, %c16_72] : memref<32x32xbf16, #tpu.memory_space<vmem>>, vector<16x16xbf16>
    tpu.vector_store %arg21[%c16_71, %c16_72], %102 {strides = array<i32>} : memref<32x32xbf16, #tpu.memory_space<vmem>>, vector<16x16xbf16>,
    %c0_73 = arith.constant 0 : index
    %c0_74 = arith.constant 0 : index
    %104 = vector.load %arg21[%c0_73, %c0_74] : memref<32x32xbf16, #tpu.memory_space<vmem>>, vector<32x32xbf16>
    %c0_75 = arith.constant 0 : index
    %c0_76 = arith.constant 0 : index
    %c0_77 = arith.constant 0 : index
    %105 = vector.load %arg11[%c0_75, %c0_76, %c0_77] : memref<1x32x32xbf16, #tpu.memory_space<vmem>>, vector<1x32x32xbf16>
    %106 = vector.shape_cast %105 : vector<1x32x32xbf16> to vector<32x32xbf16>
    %cst_78 = arith.constant dense<0.000000e+00> : vector<32x32xf32>
    %107 = tpu.matmul %104, %106, %cst_78 {dimension_numbers = #tpu.dot_dimension_numbers<[1], [0], [0], [1], [0, 0, 1, 1], [], []>} : vector<32x32xbf16>, vector<32x32xbf16>, vector<32x32xf32> -> vector<32x32xf32>
    %c0_79 = arith.constant 0 : index
    %c3 = arith.constant 3 : index
    %c0_80 = arith.constant 0 : index
    %108 = vector.load %arg14[%c0_79, %c3, %c0_80] : memref<1x9x32xf32, #tpu.memory_space<vmem>>, vector<1x1x32xf32>
    %109 = vector.shape_cast %108 : vector<1x1x32xf32> to vector<1x32xf32>
    %110 = vector.broadcast %109 : vector<1x32xf32> to vector<32x32xf32>
    %111 = arith.addf %107, %110 : vector<32x32xf32>
    %112 = arith.addf %3, %111 : vector<32x32xf32>
    %c0_81 = arith.constant 0 : index
    %c4 = arith.constant 4 : index
    %c0_82 = arith.constant 0 : index
    %113 = vector.load %arg14[%c0_81, %c4, %c0_82] : memref<1x9x32xf32, #tpu.memory_space<vmem>>, vector<1x1x32xf32>
    %114 = vector.shape_cast %113 : vector<1x1x32xf32> to vector<1x32xf32>
    %c0_83 = arith.constant 0 : index
    %c5 = arith.constant 5 : index
    %c0_84 = arith.constant 0 : index
    %115 = vector.load %arg14[%c0_83, %c5, %c0_84] : memref<1x9x32xf32, #tpu.memory_space<vmem>>, vector<1x1x32xf32>
    %116 = vector.shape_cast %115 : vector<1x1x32xf32> to vector<1x32xf32>
    %cst_85 = arith.constant dense<0.000000e+00> : vector<32xf32>
    %117 = vector.multi_reduction <add>, %112, %cst_85 [1] : vector<32x32xf32> to vector<32xf32>
    %118 = vector.shape_cast %117 : vector<32xf32> to vector<32x1xf32>
    %cst_86 = arith.constant 3.200000e+01 : f32
    %119 = vector.broadcast %cst_86 : f32 to vector<32x1xf32>
    %120 = arith.divf %118, %119 : vector<32x1xf32>
    %121 = vector.broadcast %120 : vector<32x1xf32> to vector<32x32xf32>
    %122 = arith.subf %112, %121 : vector<32x32xf32>
    %123 = arith.mulf %122, %122 : vector<32x32xf32>
    %cst_87 = arith.constant dense<0.000000e+00> : vector<32xf32>
    %124 = vector.multi_reduction <add>, %123, %cst_87 [1] : vector<32x32xf32> to vector<32xf32>
    %125 = vector.shape_cast %124 : vector<32xf32> to vector<32x1xf32>
    %cst_88 = arith.constant 3.200000e+01 : f32
    %126 = vector.broadcast %cst_88 : f32 to vector<32x1xf32>
    %127 = arith.divf %125, %126 : vector<32x1xf32>
    %128 = vector.broadcast %120 : vector<32x1xf32> to vector<32x32xf32>
    %129 = arith.subf %112, %128 : vector<32x32xf32>
    %cst_89 = arith.constant 9.99999996E-13 : f32
    %130 = vector.broadcast %cst_89 : f32 to vector<32x1xf32>
    %131 = arith.addf %127, %130 : vector<32x1xf32>
    %132 = math.rsqrt %131 : vector<32x1xf32>
    %133 = vector.broadcast %132 : vector<32x1xf32> to vector<32x32xf32>
    %134 = arith.mulf %129, %133 : vector<32x32xf32>
    %135 = vector.broadcast %114 : vector<1x32xf32> to vector<32x32xf32>
    %136 = arith.mulf %134, %135 : vector<32x32xf32>
    %137 = vector.broadcast %116 : vector<1x32xf32> to vector<32x32xf32>
    %138 = arith.addf %136, %137 : vector<32x32xf32>
    %139 = arith.truncf %138 : vector<32x32xf32> to vector<32x32xbf16>
    %c0_90 = arith.constant 0 : index
    %c0_91 = arith.constant 0 : index
    %c0_92 = arith.constant 0 : index
    %140 = vector.load %arg12[%c0_90, %c0_91, %c0_92] : memref<1x32x64xbf16, #tpu.memory_space<vmem>>, vector<1x32x64xbf16>
    %141 = vector.shape_cast %140 : vector<1x32x64xbf16> to vector<32x64xbf16>
    %cst_93 = arith.constant dense<0.000000e+00> : vector<32x64xf32>
    %142 = tpu.matmul %139, %141, %cst_93 {dimension_numbers = #tpu.dot_dimension_numbers<[1], [0], [0], [1], [0, 0, 1, 1], [], []>} : vector<32x32xbf16>, vector<32x64xbf16>, vector<32x64xf32> -> vector<32x64xf32>
    %c0_94 = arith.constant 0 : index
    %c0_95 = arith.constant 0 : index
    %c0_96 = arith.constant 0 : index
    %143 = vector.load %arg15[%c0_94, %c0_95, %c0_96] : memref<1x1x64xf32, #tpu.memory_space<vmem>>, vector<1x1x64xf32>
    %144 = vector.shape_cast %143 : vector<1x1x64xf32> to vector<1x64xf32>
    %145 = vector.broadcast %144 : vector<1x64xf32> to vector<32x64xf32>
    %146 = arith.addf %142, %145 : vector<32x64xf32>
    %147 = arith.mulf %146, %146 : vector<32x64xf32>
    %148 = arith.mulf %146, %147 : vector<32x64xf32>
    %cst_97 = arith.constant 4.471500e-02 : f32
    %149 = vector.broadcast %cst_97 : f32 to vector<32x64xf32>
    %150 = arith.mulf %149, %148 : vector<32x64xf32>
    %151 = arith.addf %146, %150 : vector<32x64xf32>
    %cst_98 = arith.constant 0.797884583 : f32
    %152 = vector.broadcast %cst_98 : f32 to vector<32x64xf32>
    %153 = arith.mulf %152, %151 : vector<32x64xf32>
    %154 = math.tanh %153 : vector<32x64xf32>
    %cst_99 = arith.constant 1.000000e+00 : f32
    %155 = vector.broadcast %cst_99 : f32 to vector<32x64xf32>
    %156 = arith.addf %155, %154 : vector<32x64xf32>
    %cst_100 = arith.constant 5.000000e-01 : f32
    %157 = vector.broadcast %cst_100 : f32 to vector<32x64xf32>
    %158 = arith.mulf %157, %156 : vector<32x64xf32>
    %159 = arith.mulf %146, %158 : vector<32x64xf32>
    %160 = arith.truncf %159 : vector<32x64xf32> to vector<32x64xbf16>
    %c0_101 = arith.constant 0 : index
    %c0_102 = arith.constant 0 : index
    %c0_103 = arith.constant 0 : index
    %161 = vector.load %arg13[%c0_101, %c0_102, %c0_103] : memref<1x64x32xbf16, #tpu.memory_space<vmem>>, vector<1x64x32xbf16>
    %162 = vector.shape_cast %161 : vector<1x64x32xbf16> to vector<64x32xbf16>
    %cst_104 = arith.constant dense<0.000000e+00> : vector<32x32xf32>
    %163 = tpu.matmul %160, %162, %cst_104 {dimension_numbers = #tpu.dot_dimension_numbers<[1], [0], [0], [1], [0, 0, 1, 1], [], []>} : vector<32x64xbf16>, vector<64x32xbf16>, vector<32x32xf32> -> vector<32x32xf32>
    %c0_105 = arith.constant 0 : index
    %c6 = arith.constant 6 : index
    %c0_106 = arith.constant 0 : index
    %164 = vector.load %arg14[%c0_105, %c6, %c0_106] : memref<1x9x32xf32, #tpu.memory_space<vmem>>, vector<1x1x32xf32>
    %165 = vector.shape_cast %164 : vector<1x1x32xf32> to vector<1x32xf32>
    %166 = vector.broadcast %165 : vector<1x32xf32> to vector<32x32xf32>
    %167 = arith.addf %163, %166 : vector<32x32xf32>
    %168 = arith.addf %138, %167 : vector<32x32xf32>
    %c0_107 = arith.constant 0 : index
    %c7 = arith.constant 7 : index
    %c0_108 = arith.constant 0 : index
    %169 = vector.load %arg14[%c0_107, %c7, %c0_108] : memref<1x9x32xf32, #tpu.memory_space<vmem>>, vector<1x1x32xf32>
    %170 = vector.shape_cast %169 : vector<1x1x32xf32> to vector<1x32xf32>
    %c0_109 = arith.constant 0 : index
    %c8 = arith.constant 8 : index
    %c0_110 = arith.constant 0 : index
    %171 = vector.load %arg14[%c0_109, %c8, %c0_110] : memref<1x9x32xf32, #tpu.memory_space<vmem>>, vector<1x1x32xf32>
    %172 = vector.shape_cast %171 : vector<1x1x32xf32> to vector<1x32xf32>
    %cst_111 = arith.constant dense<0.000000e+00> : vector<32xf32>
    %173 = vector.multi_reduction <add>, %168, %cst_111 [1] : vector<32x32xf32> to vector<32xf32>
    %174 = vector.shape_cast %173 : vector<32xf32> to vector<32x1xf32>
    %cst_112 = arith.constant 3.200000e+01 : f32
    %175 = vector.broadcast %cst_112 : f32 to vector<32x1xf32>
    %176 = arith.divf %174, %175 : vector<32x1xf32>
    %177 = vector.broadcast %176 : vector<32x1xf32> to vector<32x32xf32>
    %178 = arith.subf %168, %177 : vector<32x32xf32>
    %179 = arith.mulf %178, %178 : vector<32x32xf32>
    %cst_113 = arith.constant dense<0.000000e+00> : vector<32xf32>
    %180 = vector.multi_reduction <add>, %179, %cst_113 [1] : vector<32x32xf32> to vector<32xf32>
    %181 = vector.shape_cast %180 : vector<32xf32> to vector<32x1xf32>
    %cst_114 = arith.constant 3.200000e+01 : f32
    %182 = vector.broadcast %cst_114 : f32 to vector<32x1xf32>
    %183 = arith.divf %181, %182 : vector<32x1xf32>
    %184 = vector.broadcast %176 : vector<32x1xf32> to vector<32x32xf32>
    %185 = arith.subf %168, %184 : vector<32x32xf32>
    %cst_115 = arith.constant 9.99999996E-13 : f32
    %186 = vector.broadcast %cst_115 : f32 to vector<32x1xf32>
    %187 = arith.addf %183, %186 : vector<32x1xf32>
    %188 = math.rsqrt %187 : vector<32x1xf32>
    %189 = vector.broadcast %188 : vector<32x1xf32> to vector<32x32xf32>
    %190 = arith.mulf %185, %189 : vector<32x32xf32>
    %191 = vector.broadcast %170 : vector<1x32xf32> to vector<32x32xf32>
    %192 = arith.mulf %190, %191 : vector<32x32xf32>
    %193 = vector.broadcast %172 : vector<1x32xf32> to vector<32x32xf32>
    %194 = arith.addf %192, %193 : vector<32x32xf32>
    %c0_116 = arith.constant 0 : index
    %c0_117 = arith.constant 0 : index
    %195 = vector.load %arg17[%c0_116, %c0_117] : memref<32x32xf32, #tpu.memory_space<vmem>>, vector<32x32xf32>
    tpu.vector_store %arg17[%c0_116, %c0_117], %194 {strides = array<i32>} : memref<32x32xf32, #tpu.memory_space<vmem>>, vector<32x32xf32>,
    %c1_i32 = arith.constant 1 : i32
    %196 = arith.cmpi eq, %arg1, %c1_i32 : i32
    %197 = arith.extui %196 : i1 to i32
    %c0_i32_118 = arith.constant 0 : i32
    %198 = arith.cmpi ne, %197, %c0_i32_118 : i32
    scf.if %198 {
      %199 = vector.shape_cast %194 : vector<32x32xf32> to vector<2x16x32xf32>
      %c0_119 = arith.constant 0 : index
      %c0_120 = arith.constant 0 : index
      %c0_121 = arith.constant 0 : index
      %200 = vector.load %arg16[%c0_119, %c0_120, %c0_121] : memref<2x16x32xf32, #tpu.memory_space<vmem>>, vector<2x16x32xf32>
      tpu.vector_store %arg16[%c0_119, %c0_120, %c0_121], %199 {strides = array<i32>} : memref<2x16x32xf32, #tpu.memory_space<vmem>>, vector<2x16x32xf32>,
    } else {
    }
    return
  }
  func.func @transform_0(%arg0: i32, %arg1: i32) -> (i32, i32, i32) {
    %c0_i32 = arith.constant 0 : i32
    %c0_i32_0 = arith.constant 0 : i32
    %c0_i32_1 = arith.constant 0 : i32
    return %arg0, %c0_i32, %c0_i32_0 : i32, i32, i32
  }
  func.func @transform_1(%arg0: i32, %arg1: i32) -> (i32, i32, i32) {
    %c0_i32 = arith.constant 0 : i32
    %c0_i32_0 = arith.constant 0 : i32
    %c0_i32_1 = arith.constant 0 : i32
    return %arg0, %c0_i32, %c0_i32_0 : i32, i32, i32
  }
  func.func @transform_2(%arg0: i32, %arg1: i32) -> (i32, i32) {
    %c0_i32 = arith.constant 0 : i32
    %c0_i32_0 = arith.constant 0 : i32
    %c0_i32_1 = arith.constant 0 : i32
    return %c0_i32, %c0_i32_0 : i32, i32
  }
  func.func @transform_3(%arg0: i32, %arg1: i32) -> (i32, i32) {
    %c0_i32 = arith.constant 0 : i32
    %c0_i32_0 = arith.constant 0 : i32
    %c0_i32_1 = arith.constant 0 : i32
    return %c0_i32, %c0_i32_0 : i32, i32
  }
  func.func @transform_4(%arg0: i32, %arg1: i32) -> (i32, i32) {
    %c0_i32 = arith.constant 0 : i32
    %c0_i32_0 = arith.constant 0 : i32
    %c0_i32_1 = arith.constant 0 : i32
    return %c0_i32, %c0_i32_0 : i32, i32
  }
  func.func @transform_5(%arg0: i32, %arg1: i32) -> (i32, i32) {
    %c0_i32 = arith.constant 0 : i32
    %c0_i32_0 = arith.constant 0 : i32
    %c0_i32_1 = arith.constant 0 : i32
    return %c0_i32, %c0_i32_0 : i32, i32
  }
  func.func @transform_6(%arg0: i32, %arg1: i32) -> (i32, i32, i32) {
    %c0_i32 = arith.constant 0 : i32
    %c0_i32_0 = arith.constant 0 : i32
    %c0_i32_1 = arith.constant 0 : i32
    return %arg1, %c0_i32, %c0_i32_0 : i32, i32, i32
  }
  func.func @transform_7(%arg0: i32, %arg1: i32) -> (i32, i32, i32) {
    %c0_i32 = arith.constant 0 : i32
    %c0_i32_0 = arith.constant 0 : i32
    %c0_i32_1 = arith.constant 0 : i32
    return %arg1, %c0_i32, %c0_i32_0 : i32, i32, i32
  }
  func.func @transform_8(%arg0: i32, %arg1: i32) -> (i32, i32, i32) {
    %c0_i32 = arith.constant 0 : i32
    %c0_i32_0 = arith.constant 0 : i32
    %c0_i32_1 = arith.constant 0 : i32
    return %arg1, %c0_i32, %c0_i32_0 : i32, i32, i32
  }
  func.func @transform_9(%arg0: i32, %arg1: i32) -> (i32, i32, i32) {
    %c0_i32 = arith.constant 0 : i32
    %c0_i32_0 = arith.constant 0 : i32
    %c0_i32_1 = arith.constant 0 : i32
    return %arg1, %c0_i32, %c0_i32_0 : i32, i32, i32
  }
  func.func @transform_10(%arg0: i32, %arg1: i32) -> (i32, i32, i32) {
    %c0_i32 = arith.constant 0 : i32
    %c0_i32_0 = arith.constant 0 : i32
    %c0_i32_1 = arith.constant 0 : i32
    return %arg1, %c0_i32, %c0_i32_0 : i32, i32, i32
  }
  func.func @transform_11(%arg0: i32, %arg1: i32) -> (i32, i32, i32) {
    %c0_i32 = arith.constant 0 : i32
    %c0_i32_0 = arith.constant 0 : i32
    %c0_i32_1 = arith.constant 0 : i32
    return %arg1, %c0_i32, %c0_i32_0 : i32, i32, i32
  }
  func.func @transform_12(%arg0: i32, %arg1: i32) -> (i32, i32, i32) {
    %c0_i32 = arith.constant 0 : i32
    %c0_i32_0 = arith.constant 0 : i32
    %c0_i32_1 = arith.constant 0 : i32
    return %arg1, %c0_i32, %c0_i32_0 : i32, i32, i32
  }
  func.func @transform_13(%arg0: i32, %arg1: i32) -> (i32, i32, i32) {
    %c0_i32 = arith.constant 0 : i32
    %c0_i32_0 = arith.constant 0 : i32
    %c0_i32_1 = arith.constant 0 : i32
    return %arg1, %c0_i32, %c0_i32_0 : i32, i32, i32
  }
  func.func @transform_14(%arg0: i32, %arg1: i32) -> (i32, i32, i32) {
    %c0_i32 = arith.constant 0 : i32
    %c0_i32_0 = arith.constant 0 : i32
    %c0_i32_1 = arith.constant 0 : i32
    return %arg0, %c0_i32, %c0_i32_0 : i32, i32, i32
  }
}

</mosaic_0001>

<llo_original>
// kernel: tpu_custom_call.1
$region0: #{tpu_custom_call.1}
  #allocation0 [shape = 'u32[]', space=smem, size = 0x4, offset = 0x4, fixed_abs, tag = 'smem constant byte address 0x4 - core index']
  #allocation1 [shape = 'u32[144,128]{1,0:T(1,128)}', space=vmem, size = 0x12000, scoped, tag = 'internal scratch']
  #allocation2 [shape = 'f32[32,32]{1,0:T(8,128)}', space=vmem, size = 0x4000, scoped, tag = 'scratch operand']
  #allocation3 [shape = 'bf16[32,32]{1,0:T(16,128)(2,1)}', space=vmem, size = 0x2000, scoped, tag = 'scratch operand']
  #allocation4 [shape = 'bf16[32,32]{1,0:T(16,128)(2,1)}', space=vmem, size = 0x2000, scoped, tag = 'scratch operand']
  #allocation5 [shape = 'bf16[32,32]{1,0:T(16,128)(2,1)}', space=vmem, size = 0x2000, scoped, tag = 'scratch operand']
  #allocation6 [shape = 'bf16[32,32]{1,0:T(16,128)(2,1)}', space=vmem, size = 0x2000, scoped, tag = 'scratch operand']
  %s0 = inlined_call_operand.hbm [shape: f32[2,8,32], index: 0, kind: input, shape index: {}]
  %s1 = inlined_call_operand.hbm [shape: f32[2,8,32], index: 1, kind: input, shape index: {}]
  %s2 = inlined_call_operand.hbm [shape: f32[16,32], index: 2, kind: input, shape index: {}]
  %s3 = inlined_call_operand.vmem [shape: f32[1,32], index: 3, kind: input, shape index: {}]
  %s4 = inlined_call_operand.hbm [shape: f32[1,32], index: 4, kind: input, shape index: {}]
  %s5 = inlined_call_operand.vmem [shape: f32[1,32], index: 5, kind: input, shape index: {}]
  %s6 = inlined_call_operand.vmem [shape: bf16[2,32,32], index: 6, kind: input, shape index: {}]
  %s7 = inlined_call_operand.vmem [shape: bf16[2,32,32], index: 7, kind: input, shape index: {}]
  %s8 = inlined_call_operand.vmem [shape: bf16[2,32,32], index: 8, kind: input, shape index: {}]
  %s9 = inlined_call_operand.vmem [shape: bf16[2,32,32], index: 9, kind: input, shape index: {}]
  %s10 = inlined_call_operand.hbm [shape: bf16[2,32,64], index: 10, kind: input, shape index: {}]
  %s11 = inlined_call_operand.vmem [shape: bf16[2,64,32], index: 11, kind: input, shape index: {}]
  %s12 = inlined_call_operand.vmem [shape: f32[2,9,32], index: 12, kind: input, shape index: {}]
  %s13 = inlined_call_operand.vmem [shape: f32[2,1,64], index: 13, kind: input, shape index: {}]
  %s14 = inlined_call_operand.hbm [shape: f32[2,16,32], index: 14, kind: output, shape index: {}]
  %s15 = sld [smem:[#allocation0]]
  $region117: #{tpu_custom_call.1} parent=0
    _
  %s17 = ssub.s32 1, %s15
  %s18 = scalar_select 0, %s17, %s15
  $region1: #{tpu_custom_call.1} parent=0
    #allocation7 [shape = 'u8[8192]{0}', space=vmem, size = 0x2000, scoped, tag = 'input window, operand 0, single buffered']
    #allocation8 [shape = 's32[2]{0}', space=sflag, size = 0x8, scoped, tag = 'scoped memory for tpu_custom_call.1']
    #allocation9 [shape = 's32[2]{0}', space=sflag, size = 0x8, scoped, tag = 'scoped memory for tpu_custom_call.1']
    #allocation10 [shape = 'u8[8192]{0}', space=vmem, size = 0x2000, scoped, tag = 'input window, operand 1, single buffered']
    #allocation11 [shape = 's32[1]{0}', space=sflag, size = 0x4, scoped, tag = 'scoped memory for tpu_custom_call.1']
    #allocation12 [shape = 'u8[8192]{0}', space=vmem, size = 0x2000, scoped, tag = 'input window, operand 2, single buffered']
    #allocation13 [shape = 'u8[512]{0}', space=vmem, size = 0x400, scoped, tag = 'input window, operand 4, single buffered']
    #allocation14 [shape = 's32[1]{0}', space=sflag, size = 0x4, scoped, tag = 'scoped memory for tpu_custom_call.1']
    #allocation15 [shape = 'u8[16384]{0}', space=vmem, size = 0x4000, scoped, tag = 'input window, operand 10']
    #allocation16 [shape = 'u8[16384]{0}', space=vmem, size = 0x4000, scoped, tag = 'output window, operand 0, single buffered']
    %19 = vsyncpa [#allocation8], 0
    %20 = vsyncpa [#allocation11], 0
    %21 = vsyncpa [#allocation14], 0
    %22 = vsyncpa [#allocation9], 0
    loop: start=0, step=1, limit=4
    $region2: #{tpu_custom_call.1} parent=1 // loop_pre_header
      _
    $region3: #{tpu_custom_call.1} parent=1 // loop_header
      %s24 = sphi 0, %s28
      %p25 = scmp.ge.s32.totalorder %s24, 4
      %s31 = sphi 0, %s43
      %s32 = sphi 0, %s39
      %s33 = sphi 0, %s31
      %s34 = sphi 0, %s32
      %s35 = sphi 0, %s33
      %s36 = sphi 0, %s34
      %s46 = sphi 0, %s48
      %s49 = sphi 0, %s46
      %s50 = sphi 0, %s49
      %s66 = sphi 0, %s50
      %s72 = sphi 0, %s74
      %s75 = sphi 0, %s72
      %s76 = sphi 0, %s75
      %s92 = sphi 0, %s76
      %s96 = sphi 0, %s96
      %s98 = sphi 0, %s96
      %s99 = sphi 0, %s98
      %s113 = sphi 0, %s99
      %s117 = sphi 0, %s117
      %s119 = sphi 0, %s117
      %s120 = sphi 0, %s119
      %s134 = sphi 0, %s120
      %s138 = sphi 0, %s138
      %s140 = sphi 0, %s138
      %s141 = sphi 0, %s140
      %s155 = sphi 0, %s141
      %s159 = sphi 0, %s159
      %s161 = sphi 0, %s159
      %s162 = sphi 0, %s161
      %s176 = sphi 0, %s162
      %s182 = sphi 0, %s184
      %s185 = sphi 0, %s182
      %s186 = sphi 0, %s185
      %s202 = sphi 0, %s186
      %s208 = sphi 0, %s210
      %s211 = sphi 0, %s208
      %s212 = sphi 0, %s211
      %s228 = sphi 0, %s212
      %s234 = sphi 0, %s236
      %s237 = sphi 0, %s234
      %s238 = sphi 0, %s237
      %s254 = sphi 0, %s238
      %s260 = sphi 0, %s262
      %s263 = sphi 0, %s260
      %s264 = sphi 0, %s263
      %s280 = sphi 0, %s264
      %s286 = sphi 0, %s288
      %s289 = sphi 0, %s286
      %s290 = sphi 0, %s289
      %s306 = sphi 0, %s290
      %s312 = sphi 0, %s314
      %s315 = sphi 0, %s312
      %s316 = sphi 0, %s315
      %s332 = sphi 0, %s316
      %s338 = sphi 0, %s340
      %s341 = sphi 0, %s338
      %s342 = sphi 0, %s341
      %s358 = sphi 0, %s342
      %s364 = sphi 0, %s366
      %s367 = sphi 0, %s364
      %s368 = sphi 0, %s367
      %s384 = sphi 0, %s368
      %s390 = sphi 0, %s392
      %s393 = sphi 0, %s390
      %s394 = sphi 0, %s393
      %s410 = sphi 0, %s394
    $region4: #{tpu_custom_call.1} parent=1 // loop_header_branch
      %27 = sbr.rel (%p25) target = $region8
    $region5: #{tpu_custom_call.1} parent=1 // loop_body
      %s29 = ssub.s32 %s24, 1
      %s30 = ssub.s32 %s24, 2
      %s37 = sadd.s32 1, %s32
      %p38 = scmp.ge.s32.totalorder %s37, 2
      %s39 = scalar_select %p38, 0, %s37
      %s40 = sadd.s32 1, %s31
      %s41 = scalar_select %p38, %s40, %s31
      %p42 = scmp.ge.s32.totalorder %s41, 1
      %s43 = scalar_select %p42, 0, %s41
      %s44 = ssub.s32 %s31, %s43
      %p45 = scmp.eq.s32.totalorder %s44, 0
      %s47 = sadd.s32 %s46, 1
      %s48 = scalar_select %p45, %s46, %s47
      %p51 = pneg %p45
      %p52 = scmp.eq.s32.totalorder %s24, 1
      %p53 = por %p51, %p52
      %p54 = scmp.ne.s32.totalorder %s46, %s49
      %p55 = scmp.eq.s32.totalorder %s24, 0
      %p56 = por %p54, %p55
      %p57 = scmp.ne.s32.totalorder %s46, %s49
      %p58 = scmp.eq.s32.totalorder %s29, 1
      %p59 = por %p57, %p58
      %p60 = scmp.ne.s32.totalorder %s49, %s50
      %p61 = scmp.eq.s32.totalorder %s29, 0
      %p62 = por %p60, %p61
      %p63 = scmp.ne.s32.totalorder %s49, %s50
      %p64 = scmp.eq.s32.totalorder %s30, 1
      %p65 = por %p63, %p64
      %p67 = scmp.ne.s32.totalorder %s50, %s66
      %p68 = scmp.eq.s32.totalorder %s30, 0
      %p69 = por %p67, %p68
      %s70 = ssub.s32 %s31, %s43
      %p71 = scmp.eq.s32.totalorder %s70, 0
      %s73 = sadd.s32 %s72, 1
      %s74 = scalar_select %p71, %s72, %s73
      %p77 = pneg %p71
      %p78 = scmp.eq.s32.totalorder %s24, 1
      %p79 = por %p77, %p78
      %p80 = scmp.ne.s32.totalorder %s72, %s75
      %p81 = scmp.eq.s32.totalorder %s24, 0
      %p82 = por %p80, %p81
      %p83 = scmp.ne.s32.totalorder %s72, %s75
      %p84 = scmp.eq.s32.totalorder %s29, 1
      %p85 = por %p83, %p84
      %p86 = scmp.ne.s32.totalorder %s75, %s76
      %p87 = scmp.eq.s32.totalorder %s29, 0
      %p88 = por %p86, %p87
      %p89 = scmp.ne.s32.totalorder %s75, %s76
      %p90 = scmp.eq.s32.totalorder %s30, 1
      %p91 = por %p89, %p90
      %p93 = scmp.ne.s32.totalorder %s76, %s92
      %p94 = scmp.eq.s32.totalorder %s30, 0
      %p95 = por %p93, %p94
      %s97 = sadd.s32 %s96, 1
      %p100 = scmp.eq.s32.totalorder %s24, 1
      %p101 = scmp.ne.s32.totalorder %s96, %s98
      %p102 = scmp.eq.s32.totalorder %s24, 0
      %p103 = por %p101, %p102
      %p104 = scmp.ne.s32.totalorder %s96, %s98
      %p105 = scmp.eq.s32.totalorder %s29, 1
      %p106 = por %p104, %p105
      %p107 = scmp.ne.s32.totalorder %s98, %s99
      %p108 = scmp.eq.s32.totalorder %s29, 0
      %p109 = por %p107, %p108
      %p110 = scmp.ne.s32.totalorder %s98, %s99
      %p111 = scmp.eq.s32.totalorder %s30, 1
      %p112 = por %p110, %p111
      %p114 = scmp.ne.s32.totalorder %s99, %s113
      %p115 = scmp.eq.s32.totalorder %s30, 0
      %p116 = por %p114, %p115
      %s118 = sadd.s32 %s117, 1
      %p121 = scmp.eq.s32.totalorder %s24, 1
      %p122 = scmp.ne.s32.totalorder %s117, %s119
      %p123 = scmp.eq.s32.totalorder %s24, 0
      %p124 = por %p122, %p123
      %p125 = scmp.ne.s32.totalorder %s117, %s119
      %p126 = scmp.eq.s32.totalorder %s29, 1
      %p127 = por %p125, %p126
      %p128 = scmp.ne.s32.totalorder %s119, %s120
      %p129 = scmp.eq.s32.totalorder %s29, 0
      %p130 = por %p128, %p129
      %p131 = scmp.ne.s32.totalorder %s119, %s120
      %p132 = scmp.eq.s32.totalorder %s30, 1
      %p133 = por %p131, %p132
      %p135 = scmp.ne.s32.totalorder %s120, %s134
      %p136 = scmp.eq.s32.totalorder %s30, 0
      %p137 = por %p135, %p136
      %s139 = sadd.s32 %s138, 1
      %p142 = scmp.eq.s32.totalorder %s24, 1
      %p143 = scmp.ne.s32.totalorder %s138, %s140
      %p144 = scmp.eq.s32.totalorder %s24, 0
      %p145 = por %p143, %p144
      %p146 = scmp.ne.s32.totalorder %s138, %s140
      %p147 = scmp.eq.s32.totalorder %s29, 1
      %p148 = por %p146, %p147
      %p149 = scmp.ne.s32.totalorder %s140, %s141
      %p150 = scmp.eq.s32.totalorder %s29, 0
      %p151 = por %p149, %p150
      %p152 = scmp.ne.s32.totalorder %s140, %s141
      %p153 = scmp.eq.s32.totalorder %s30, 1
      %p154 = por %p152, %p153
      %p156 = scmp.ne.s32.totalorder %s141, %s155
      %p157 = scmp.eq.s32.totalorder %s30, 0
      %p158 = por %p156, %p157
      %s160 = sadd.s32 %s159, 1
      %p163 = scmp.eq.s32.totalorder %s24, 1
      %p164 = scmp.ne.s32.totalorder %s159, %s161
      %p165 = scmp.eq.s32.totalorder %s24, 0
      %p166 = por %p164, %p165
      %p167 = scmp.ne.s32.totalorder %s159, %s161
      %p168 = scmp.eq.s32.totalorder %s29, 1
      %p169 = por %p167, %p168
      %p170 = scmp.ne.s32.totalorder %s161, %s162
      %p171 = scmp.eq.s32.totalorder %s29, 0
      %p172 = por %p170, %p171
      %p173 = scmp.ne.s32.totalorder %s161, %s162
      %p174 = scmp.eq.s32.totalorder %s30, 1
      %p175 = por %p173, %p174
      %p177 = scmp.ne.s32.totalorder %s162, %s176
      %p178 = scmp.eq.s32.totalorder %s30, 0
      %p179 = por %p177, %p178
      %s180 = ssub.s32 %s32, %s39
      %p181 = scmp.eq.s32.totalorder %s180, 0
      %s183 = sadd.s32 %s182, 1
      %s184 = scalar_select %p181, %s182, %s183
      %p187 = pneg %p181
      %p188 = scmp.eq.s32.totalorder %s24, 1
      %p189 = por %p187, %p188
      %p190 = scmp.ne.s32.totalorder %s182, %s185
      %p191 = scmp.eq.s32.totalorder %s24, 0
      %p192 = por %p190, %p191
      %p193 = scmp.ne.s32.totalorder %s182, %s185
      %p194 = scmp.eq.s32.totalorder %s29, 1
      %p195 = por %p193, %p194
      %p196 = scmp.ne.s32.totalorder %s185, %s186
      %p197 = scmp.eq.s32.totalorder %s29, 0
      %p198 = por %p196, %p197
      %p199 = scmp.ne.s32.totalorder %s185, %s186
      %p200 = scmp.eq.s32.totalorder %s30, 1
      %p201 = por %p199, %p200
      %p203 = scmp.ne.s32.totalorder %s186, %s202
      %p204 = scmp.eq.s32.totalorder %s30, 0
      %p205 = por %p203, %p204
      %s206 = ssub.s32 %s32, %s39
      %p207 = scmp.eq.s32.totalorder %s206, 0
      %s209 = sadd.s32 %s208, 1
      %s210 = scalar_select %p207, %s208, %s209
      %p213 = pneg %p207
      %p214 = scmp.eq.s32.totalorder %s24, 1
      %p215 = por %p213, %p214
      %p216 = scmp.ne.s32.totalorder %s208, %s211
      %p217 = scmp.eq.s32.totalorder %s24, 0
      %p218 = por %p216, %p217
      %p219 = scmp.ne.s32.totalorder %s208, %s211
      %p220 = scmp.eq.s32.totalorder %s29, 1
      %p221 = por %p219, %p220
      %p222 = scmp.ne.s32.totalorder %s211, %s212
      %p223 = scmp.eq.s32.totalorder %s29, 0
      %p224 = por %p222, %p223
      %p225 = scmp.ne.s32.totalorder %s211, %s212
      %p226 = scmp.eq.s32.totalorder %s30, 1
      %p227 = por %p225, %p226
      %p229 = scmp.ne.s32.totalorder %s212, %s228
      %p230 = scmp.eq.s32.totalorder %s30, 0
      %p231 = por %p229, %p230
      %s232 = ssub.s32 %s32, %s39
      %p233 = scmp.eq.s32.totalorder %s232, 0
      %s235 = sadd.s32 %s234, 1
      %s236 = scalar_select %p233, %s234, %s235
      %p239 = pneg %p233
      %p240 = scmp.eq.s32.totalorder %s24, 1
      %p241 = por %p239, %p240
      %p242 = scmp.ne.s32.totalorder %s234, %s237
      %p243 = scmp.eq.s32.totalorder %s24, 0
      %p244 = por %p242, %p243
      %p245 = scmp.ne.s32.totalorder %s234, %s237
      %p246 = scmp.eq.s32.totalorder %s29, 1
      %p247 = por %p245, %p246
      %p248 = scmp.ne.s32.totalorder %s237, %s238
      %p249 = scmp.eq.s32.totalorder %s29, 0
      %p250 = por %p248, %p249
      %p251 = scmp.ne.s32.totalorder %s237, %s238
      %p252 = scmp.eq.s32.totalorder %s30, 1
      %p253 = por %p251, %p252
      %p255 = scmp.ne.s32.totalorder %s238, %s254
      %p256 = scmp.eq.s32.totalorder %s30, 0
      %p257 = por %p255, %p256
      %s258 = ssub.s32 %s32, %s39
      %p259 = scmp.eq.s32.totalorder %s258, 0
      %s261 = sadd.s32 %s260, 1
      %s262 = scalar_select %p259, %s260, %s261
      %p265 = pneg %p259
      %p266 = scmp.eq.s32.totalorder %s24, 1
      %p267 = por %p265, %p266
      %p268 = scmp.ne.s32.totalorder %s260, %s263
      %p269 = scmp.eq.s32.totalorder %s24, 0
      %p270 = por %p268, %p269
      %p271 = scmp.ne.s32.totalorder %s260, %s263
      %p272 = scmp.eq.s32.totalorder %s29, 1
      %p273 = por %p271, %p272
      %p274 = scmp.ne.s32.totalorder %s263, %s264
      %p275 = scmp.eq.s32.totalorder %s29, 0
      %p276 = por %p274, %p275
      %p277 = scmp.ne.s32.totalorder %s263, %s264
      %p278 = scmp.eq.s32.totalorder %s30, 1
      %p279 = por %p277, %p278
      %p281 = scmp.ne.s32.totalorder %s264, %s280
      %p282 = scmp.eq.s32.totalorder %s30, 0
      %p283 = por %p281, %p282
      %s284 = ssub.s32 %s32, %s39
      %p285 = scmp.eq.s32.totalorder %s284, 0
      %s287 = sadd.s32 %s286, 1
      %s288 = scalar_select %p285, %s286, %s287
      %p291 = pneg %p285
      %p292 = scmp.eq.s32.totalorder %s24, 1
      %p293 = por %p291, %p292
      %p294 = scmp.ne.s32.totalorder %s286, %s289
      %p295 = scmp.eq.s32.totalorder %s24, 0
      %p296 = por %p294, %p295
      %p297 = scmp.ne.s32.totalorder %s286, %s289
      %p298 = scmp.eq.s32.totalorder %s29, 1
      %p299 = por %p297, %p298
      %p300 = scmp.ne.s32.totalorder %s289, %s290
      %p301 = scmp.eq.s32.totalorder %s29, 0
      %p302 = por %p300, %p301
      %p303 = scmp.ne.s32.totalorder %s289, %s290
      %p304 = scmp.eq.s32.totalorder %s30, 1
      %p305 = por %p303, %p304
      %p307 = scmp.ne.s32.totalorder %s290, %s306
      %p308 = scmp.eq.s32.totalorder %s30, 0
      %p309 = por %p307, %p308
      %s310 = ssub.s32 %s32, %s39
      %p311 = scmp.eq.s32.totalorder %s310, 0
      %s313 = sadd.s32 %s312, 1
      %s314 = scalar_select %p311, %s312, %s313
      %p317 = pneg %p311
      %p318 = scmp.eq.s32.totalorder %s24, 1
      %p319 = por %p317, %p318
      %p320 = scmp.ne.s32.totalorder %s312, %s315
      %p321 = scmp.eq.s32.totalorder %s24, 0
      %p322 = por %p320, %p321
      %p323 = scmp.ne.s32.totalorder %s312, %s315
      %p324 = scmp.eq.s32.totalorder %s29, 1
      %p325 = por %p323, %p324
      %p326 = scmp.ne.s32.totalorder %s315, %s316
      %p327 = scmp.eq.s32.totalorder %s29, 0
      %p328 = por %p326, %p327
      %p329 = scmp.ne.s32.totalorder %s315, %s316
      %p330 = scmp.eq.s32.totalorder %s30, 1
      %p331 = por %p329, %p330
      %p333 = scmp.ne.s32.totalorder %s316, %s332
      %p334 = scmp.eq.s32.totalorder %s30, 0
      %p335 = por %p333, %p334
      %s336 = ssub.s32 %s32, %s39
      %p337 = scmp.eq.s32.totalorder %s336, 0
      %s339 = sadd.s32 %s338, 1
      %s340 = scalar_select %p337, %s338, %s339
      %p343 = pneg %p337
      %p344 = scmp.eq.s32.totalorder %s24, 1
      %p345 = por %p343, %p344
      %p346 = scmp.ne.s32.totalorder %s338, %s341
      %p347 = scmp.eq.s32.totalorder %s24, 0
      %p348 = por %p346, %p347
      %p349 = scmp.ne.s32.totalorder %s338, %s341
      %p350 = scmp.eq.s32.totalorder %s29, 1
      %p351 = por %p349, %p350
      %p352 = scmp.ne.s32.totalorder %s341, %s342
      %p353 = scmp.eq.s32.totalorder %s29, 0
      %p354 = por %p352, %p353
      %p355 = scmp.ne.s32.totalorder %s341, %s342
      %p356 = scmp.eq.s32.totalorder %s30, 1
      %p357 = por %p355, %p356
      %p359 = scmp.ne.s32.totalorder %s342, %s358
      %p360 = scmp.eq.s32.totalorder %s30, 0
      %p361 = por %p359, %p360
      %s362 = ssub.s32 %s32, %s39
      %p363 = scmp.eq.s32.totalorder %s362, 0
      %s365 = sadd.s32 %s364, 1
      %s366 = scalar_select %p363, %s364, %s365
      %p369 = pneg %p363
      %p370 = scmp.eq.s32.totalorder %s24, 1
      %p371 = por %p369, %p370
      %p372 = scmp.ne.s32.totalorder %s364, %s367
      %p373 = scmp.eq.s32.totalorder %s24, 0
      %p374 = por %p372, %p373
      %p375 = scmp.ne.s32.totalorder %s364, %s367
      %p376 = scmp.eq.s32.totalorder %s29, 1
      %p377 = por %p375, %p376
      %p378 = scmp.ne.s32.totalorder %s367, %s368
      %p379 = scmp.eq.s32.totalorder %s29, 0
      %p380 = por %p378, %p379
      %p381 = scmp.ne.s32.totalorder %s367, %s368
      %p382 = scmp.eq.s32.totalorder %s30, 1
      %p383 = por %p381, %p382
      %p385 = scmp.ne.s32.totalorder %s368, %s384
      %p386 = scmp.eq.s32.totalorder %s30, 0
      %p387 = por %p385, %p386
      %s388 = ssub.s32 %s31, %s43
      %p389 = scmp.eq.s32.totalorder %s388, 0
      %s391 = sadd.s32 %s390, 1
      %s392 = scalar_select %p389, %s390, %s391
      %p395 = pneg %p389
      %p396 = scmp.eq.s32.totalorder %s24, 1
      %p397 = por %p395, %p396
      %p398 = scmp.ne.s32.totalorder %s390, %s393
      %p399 = scmp.eq.s32.totalorder %s24, 0
      %p400 = por %p398, %p399
      %p401 = scmp.ne.s32.totalorder %s390, %s393
      %p402 = scmp.eq.s32.totalorder %s29, 1
      %p403 = por %p401, %p402
      %p404 = scmp.ne.s32.totalorder %s393, %s394
      %p405 = scmp.eq.s32.totalorder %s29, 0
      %p406 = por %p404, %p405
      %p407 = scmp.ne.s32.totalorder %s393, %s394
      %p408 = scmp.eq.s32.totalorder %s30, 1
      %p409 = por %p407, %p408
      %p411 = scmp.ne.s32.totalorder %s394, %s410
      %p412 = scmp.eq.s32.totalorder %s30, 0
      %p413 = por %p411, %p412
      %p414 = scmp.le.s32.totalorder 1, %s24
      %p415 = scmp.lt.s32.totalorder %s24, 3
      %p416 = pnand %p414, %p415
      %p417 = pneg %p416
      // Predicated region
      $region9: #{tpu_custom_call.1} parent=5 // pred_check
        _
      $region10: #{tpu_custom_call.1} parent=5 // pred_check_branch
        %419 = sbr.rel (%p416) target = $region12
      $region11: #{tpu_custom_call.1} parent=5 // pred_region
        %s420 = ssub.s32 %s24, 1
        // Predicated region
        $region13: #{tpu_custom_call.1} parent=11 // pred_check
          %p421 = pneg %p62
        $region14: #{tpu_custom_call.1} parent=11 // pred_check_branch
          %423 = sbr.rel (%p421) target = $region16
        $region15: #{tpu_custom_call.1} parent=11 // pred_region
          %s424 = smul.u32 2, %s33
          %s426 = ssub.s32 256, 256
          %427 = vsyncadd [#allocation8], %s426
          %s428 = smul.addr %s424, 128
          %s429 = scalar_lea.hbm %s0, %s428
          %s430 = sshll.u32 [#allocation7], 4
          %s431 = int_to_ptr.vmem [resolvable:$true] %s430
          %436 = dma.hbm_to_vmem [thread:$0]  %s429, 256, %s431, [#allocation8], 128, 128, 8
        $region16: #{tpu_custom_call.1} parent=11 // pred_fallthru
          _
        // Predicated region
        $region17: #{tpu_custom_call.1} parent=11 // pred_check
          %p437 = pneg %p88
        $region18: #{tpu_custom_call.1} parent=11 // pred_check_branch
          %439 = sbr.rel (%p437) target = $region20
        $region19: #{tpu_custom_call.1} parent=11 // pred_region
          %s440 = smul.u32 2, %s33
          %s442 = ssub.s32 256, 256
          %443 = vsyncadd [#allocation11], %s442
          %s444 = smul.addr %s440, 128
          %s445 = scalar_lea.hbm %s1, %s444
          %s446 = sshll.u32 [#allocation10], 4
          %s447 = int_to_ptr.vmem [resolvable:$true] %s446
          %452 = dma.hbm_to_vmem [thread:$0]  %s445, 256, %s447, [#allocation11], 128, 128, 8
        $region20: #{tpu_custom_call.1} parent=11 // pred_fallthru
          _
        // Predicated region
        $region21: #{tpu_custom_call.1} parent=11 // pred_check
          %p453 = pneg %p109
        $region22: #{tpu_custom_call.1} parent=11 // pred_check_branch
          %455 = sbr.rel (%p453) target = $region24
        $region23: #{tpu_custom_call.1} parent=11 // pred_region
          %s457 = ssub.s32 256, 256
          %458 = vsyncadd [#allocation11], %s457
          %s459 = sshll.u32 [#allocation12], 4
          %s460 = int_to_ptr.vmem [resolvable:$true] %s459
          %465 = dma.hbm_to_vmem [thread:$0]  %s2, 256, %s460, [#allocation11], 128, 128, 8
        $region24: #{tpu_custom_call.1} parent=11 // pred_fallthru
          _
        // Predicated region
        $region25: #{tpu_custom_call.1} parent=11 // pred_check
          %p466 = pneg %p130
        $region26: #{tpu_custom_call.1} parent=11 // pred_check_branch
          %468 = sbr.rel (%p466) target = $region28
        $region27: #{tpu_custom_call.1} parent=11 // pred_region
          _
        $region28: #{tpu_custom_call.1} parent=11 // pred_fallthru
          _
        // Predicated region
        $region29: #{tpu_custom_call.1} parent=11 // pred_check
          %p469 = pneg %p151
        $region30: #{tpu_custom_call.1} parent=11 // pred_check_branch
          %471 = sbr.rel (%p469) target = $region32
        $region31: #{tpu_custom_call.1} parent=11 // pred_region
          %s473 = ssub.s32 16, 16
          %474 = vsyncadd [#allocation14], %s473
          %s476 = sshll.u32 [#allocation13], 4
          %s477 = int_to_ptr.vmem [resolvable:$true] %s476
          %479 = dma.hbm_to_vmem [thread:$0]  %s4, 16, %s477, [#allocation14]
        $region32: #{tpu_custom_call.1} parent=11 // pred_fallthru
          _
        // Predicated region
        $region33: #{tpu_custom_call.1} parent=11 // pred_check
          %p480 = pneg %p172
        $region34: #{tpu_custom_call.1} parent=11 // pred_check_branch
          %482 = sbr.rel (%p480) target = $region36
        $region35: #{tpu_custom_call.1} parent=11 // pred_region
          _
        $region36: #{tpu_custom_call.1} parent=11 // pred_fallthru
          _
      $region12: #{tpu_custom_call.1} parent=5 // pred_fallthru
        _
      %p483 = scmp.lt.s32.totalorder %s24, 2
      // Predicated region
      $region37: #{tpu_custom_call.1} parent=5 // pred_check
        %p484 = pneg %p483
      $region38: #{tpu_custom_call.1} parent=5 // pred_check_branch
        %486 = sbr.rel (%p484) target = $region40
      $region39: #{tpu_custom_call.1} parent=5 // pred_region
        // Predicated region
        $region41: #{tpu_custom_call.1} parent=39 // pred_check
          %p487 = pneg %p192
        $region42: #{tpu_custom_call.1} parent=39 // pred_check_branch
          %489 = sbr.rel (%p487) target = $region44
        $region43: #{tpu_custom_call.1} parent=39 // pred_region
          %p490 = scmp.lt.s32.totalorder %s32, 1
          %s491 = scalar_select %p490, %s32, 1
          %s492 = smul.addr %s491, 4
          %s493 = smul.addr %s492, 4
          %s494 = scalar_lea.vmem %s6, %s493
        $region44: #{tpu_custom_call.1} parent=39 // pred_fallthru
          _
        // Predicated region
        $region45: #{tpu_custom_call.1} parent=39 // pred_check
          %p495 = pneg %p218
        $region46: #{tpu_custom_call.1} parent=39 // pred_check_branch
          %497 = sbr.rel (%p495) target = $region48
        $region47: #{tpu_custom_call.1} parent=39 // pred_region
          %p498 = scmp.lt.s32.totalorder %s32, 1
          %s499 = scalar_select %p498, %s32, 1
          %s500 = smul.addr %s499, 4
          %s501 = smul.addr %s500, 4
          %s502 = scalar_lea.vmem %s7, %s501
        $region48: #{tpu_custom_call.1} parent=39 // pred_fallthru
          _
        // Predicated region
        $region49: #{tpu_custom_call.1} parent=39 // pred_check
          %p503 = pneg %p244
        $region50: #{tpu_custom_call.1} parent=39 // pred_check_branch
          %505 = sbr.rel (%p503) target = $region52
        $region51: #{tpu_custom_call.1} parent=39 // pred_region
          %p506 = scmp.lt.s32.totalorder %s32, 1
          %s507 = scalar_select %p506, %s32, 1
          %s508 = smul.addr %s507, 4
          %s509 = smul.addr %s508, 4
          %s510 = scalar_lea.vmem %s8, %s509
        $region52: #{tpu_custom_call.1} parent=39 // pred_fallthru
          _
        // Predicated region
        $region53: #{tpu_custom_call.1} parent=39 // pred_check
          %p511 = pneg %p270
        $region54: #{tpu_custom_call.1} parent=39 // pred_check_branch
          %513 = sbr.rel (%p511) target = $region56
        $region55: #{tpu_custom_call.1} parent=39 // pred_region
          %p514 = scmp.lt.s32.totalorder %s32, 1
          %s515 = scalar_select %p514, %s32, 1
          %s516 = smul.addr %s515, 4
          %s517 = smul.addr %s516, 4
          %s518 = scalar_lea.vmem %s9, %s517
        $region56: #{tpu_custom_call.1} parent=39 // pred_fallthru
          _
        // Predicated region
        $region57: #{tpu_custom_call.1} parent=39 // pred_check
          %p519 = pneg %p296
        $region58: #{tpu_custom_call.1} parent=39 // pred_check_branch
          %521 = sbr.rel (%p519) target = $region60
        $region59: #{tpu_custom_call.1} parent=39 // pred_region
          %s522 = sand.u32 %s24, 1
          %s523 = scalar_lea.sflag [#allocation8], %s522
          %s524 = sand.u32 %s286, 1
          %s525 = smul.addr %s524, 16
          %s526 = scalar_lea.vmem [#allocation15], %s525
          %s528 = ssub.s32 256, 256
          %529 = vsyncadd %s523, %s528
          %s530 = smul.addr %s32, 4
          %s531 = smul.addr %s530, 64
          %s532 = scalar_lea.hbm %s10, %s531
          %s533 = sshll.u32 %s526, 4
          %s534 = int_to_ptr.vmem [resolvable:$true] %s533
          %539 = dma.hbm_to_vmem [thread:$0]  %s532, 256, %s534, %s523, 64, 64, 4
        $region60: #{tpu_custom_call.1} parent=39 // pred_fallthru
          _
        // Predicated region
        $region61: #{tpu_custom_call.1} parent=39 // pred_check
          %p540 = pneg %p322
        $region62: #{tpu_custom_call.1} parent=39 // pred_check_branch
          %542 = sbr.rel (%p540) target = $region64
        $region63: #{tpu_custom_call.1} parent=39 // pred_region
          %p543 = scmp.lt.s32.totalorder %s32, 1
          %s544 = scalar_select %p543, %s32, 1
          %s545 = smul.addr %s544, 8
          %s546 = smul.addr %s545, 4
          %s547 = scalar_lea.vmem %s11, %s546
        $region64: #{tpu_custom_call.1} parent=39 // pred_fallthru
          _
        // Predicated region
        $region65: #{tpu_custom_call.1} parent=39 // pred_check
          %p548 = pneg %p348
        $region66: #{tpu_custom_call.1} parent=39 // pred_check_branch
          %550 = sbr.rel (%p548) target = $region68
        $region67: #{tpu_custom_call.1} parent=39 // pred_region
          %p551 = scmp.lt.s32.totalorder %s32, 1
          %s552 = scalar_select %p551, %s32, 1
          %s553 = smul.addr %s552, 2
          %s554 = smul.addr %s553, 8
          %s555 = scalar_lea.vmem %s12, %s554
        $region68: #{tpu_custom_call.1} parent=39 // pred_fallthru
          _
        // Predicated region
        $region69: #{tpu_custom_call.1} parent=39 // pred_check
          %p556 = pneg %p374
        $region70: #{tpu_custom_call.1} parent=39 // pred_check_branch
          %558 = sbr.rel (%p556) target = $region72
        $region71: #{tpu_custom_call.1} parent=39 // pred_region
          %p559 = scmp.lt.s32.totalorder %s32, 1
          %s560 = scalar_select %p559, %s32, 1
          %s561 = scalar_lea.vmem %s13, %s560
        $region72: #{tpu_custom_call.1} parent=39 // pred_fallthru
          _
      $region40: #{tpu_custom_call.1} parent=5 // pred_fallthru
        _
      %p562 = scmp.le.s32.totalorder 1, %s24
      %p563 = scmp.lt.s32.totalorder %s24, 3
      %p564 = pnand %p562, %p563
      %p565 = pneg %p564
      // Predicated region
      $region73: #{tpu_custom_call.1} parent=5 // pred_check
        _
      $region74: #{tpu_custom_call.1} parent=5 // pred_check_branch
        %567 = sbr.rel (%p564) target = $region76
      $region75: #{tpu_custom_call.1} parent=5 // pred_region
        %s568 = ssub.s32 %s24, 1
        // Predicated region
        $region77: #{tpu_custom_call.1} parent=75 // pred_check
          %p569 = pneg %p62
        $region78: #{tpu_custom_call.1} parent=75 // pred_check_branch
          %571 = sbr.rel (%p569) target = $region80
        $region79: #{tpu_custom_call.1} parent=75 // pred_region
          %572 = dma.done [#allocation8], 256
        $region80: #{tpu_custom_call.1} parent=75 // pred_fallthru
          _
        // Predicated region
        $region81: #{tpu_custom_call.1} parent=75 // pred_check
          %p573 = pneg %p88
        $region82: #{tpu_custom_call.1} parent=75 // pred_check_branch
          %575 = sbr.rel (%p573) target = $region84
        $region83: #{tpu_custom_call.1} parent=75 // pred_region
          %576 = dma.done [#allocation11], 256
        $region84: #{tpu_custom_call.1} parent=75 // pred_fallthru
          _
        // Predicated region
        $region85: #{tpu_custom_call.1} parent=75 // pred_check
          %p577 = pneg %p109
        $region86: #{tpu_custom_call.1} parent=75 // pred_check_branch
          %579 = sbr.rel (%p577) target = $region88
        $region87: #{tpu_custom_call.1} parent=75 // pred_region
          %580 = dma.done [#allocation11], 256
        $region88: #{tpu_custom_call.1} parent=75 // pred_fallthru
          _
        // Predicated region
        $region89: #{tpu_custom_call.1} parent=75 // pred_check
          %p581 = pneg %p151
        $region90: #{tpu_custom_call.1} parent=75 // pred_check_branch
          %583 = sbr.rel (%p581) target = $region92
        $region91: #{tpu_custom_call.1} parent=75 // pred_region
          %584 = dma.done [#allocation14], 16
        $region92: #{tpu_custom_call.1} parent=75 // pred_fallthru
          _
        %s585 = sand.u32 %s29, 1
        %s586 = scalar_lea.sflag [#allocation8], %s585
        %s587 = sand.u32 %s289, 1
        %s588 = smul.addr %s587, 16
        %s589 = scalar_lea.vmem [#allocation15], %s588
        // Predicated region
        $region93: #{tpu_custom_call.1} parent=75 // pred_check
          %p590 = pneg %p302
        $region94: #{tpu_custom_call.1} parent=75 // pred_check_branch
          %592 = sbr.rel (%p590) target = $region96
        $region95: #{tpu_custom_call.1} parent=75 // pred_region
          %593 = dma.done %s586, 256
        $region96: #{tpu_custom_call.1} parent=75 // pred_fallthru
          _
        %p594 = pneg %p62
        %p595 = pneg %p59
        %p596 = pneg %p88
        %p597 = pneg %p85
        %p598 = pneg %p109
        %p599 = pneg %p106
        %p600 = pneg %p130
        %p601 = pneg %p127
        %p602 = pneg %p151
        %p603 = pneg %p148
        %p604 = pneg %p172
        %p605 = pneg %p169
        %p606 = scmp.lt.s32.totalorder %s34, 1
        %s607 = scalar_select %p606, %s34, 1
        %s608 = smul.addr %s607, 4
        %s609 = smul.addr %s608, 4
        %s610 = scalar_lea.vmem %s6, %s609
        %p611 = pneg %p198
        %p612 = pneg %p195
        %p613 = scmp.lt.s32.totalorder %s34, 1
        %s614 = scalar_select %p613, %s34, 1
        %s615 = smul.addr %s614, 4
        %s616 = smul.addr %s615, 4
        %s617 = scalar_lea.vmem %s7, %s616
        %p618 = pneg %p224
        %p619 = pneg %p221
        %p620 = scmp.lt.s32.totalorder %s34, 1
        %s621 = scalar_select %p620, %s34, 1
        %s622 = smul.addr %s621, 4
        %s623 = smul.addr %s622, 4
        %s624 = scalar_lea.vmem %s8, %s623
        %p625 = pneg %p250
        %p626 = pneg %p247
        %p627 = scmp.lt.s32.totalorder %s34, 1
        %s628 = scalar_select %p627, %s34, 1
        %s629 = smul.addr %s628, 4
        %s630 = smul.addr %s629, 4
        %s631 = scalar_lea.vmem %s9, %s630
        %p632 = pneg %p276
        %p633 = pneg %p273
        %s634 = sand.u32 %s29, 1
        %s635 = scalar_lea.sflag [#allocation8], %s634
        %s636 = sand.u32 %s289, 1
        %s637 = smul.addr %s636, 16
        %s638 = scalar_lea.vmem [#allocation15], %s637
        %p639 = pneg %p302
        %p640 = pneg %p299
        %p641 = scmp.lt.s32.totalorder %s34, 1
        %s642 = scalar_select %p641, %s34, 1
        %s643 = smul.addr %s642, 8
        %s644 = smul.addr %s643, 4
        %s645 = scalar_lea.vmem %s11, %s644
        %p646 = pneg %p328
        %p647 = pneg %p325
        %p648 = scmp.lt.s32.totalorder %s34, 1
        %s649 = scalar_select %p648, %s34, 1
        %s650 = smul.addr %s649, 2
        %s651 = smul.addr %s650, 8
        %s652 = scalar_lea.vmem %s12, %s651
        %p653 = pneg %p354
        %p654 = pneg %p351
        %p655 = scmp.lt.s32.totalorder %s34, 1
        %s656 = scalar_select %p655, %s34, 1
        %s657 = scalar_lea.vmem %s13, %s656
        %p658 = pneg %p380
        %p659 = pneg %p377
        %p660 = pneg %p406
        %p661 = pneg %p403
        %s662 = smul.u32 2, %s33
        %s663 = smul.u32 2, %s33
        %p664 = scmp.lt.s32.totalorder %s34, 1
        %s665 = scalar_select %p664, %s34, 1
        %s666 = smul.addr %s665, 4
        %s667 = smul.addr %s666, 4
        %s668 = scalar_lea.vmem %s6, %s667
        %p669 = scmp.lt.s32.totalorder %s34, 1
        %s670 = scalar_select %p669, %s34, 1
        %s671 = smul.addr %s670, 4
        %s672 = smul.addr %s671, 4
        %s673 = scalar_lea.vmem %s7, %s672
        %p674 = scmp.lt.s32.totalorder %s34, 1
        %s675 = scalar_select %p674, %s34, 1
        %s676 = smul.addr %s675, 4
        %s677 = smul.addr %s676, 4
        %s678 = scalar_lea.vmem %s8, %s677
        %p679 = scmp.lt.s32.totalorder %s34, 1
        %s680 = scalar_select %p679, %s34, 1
        %s681 = smul.addr %s680, 4
        %s682 = smul.addr %s681, 4
        %s683 = scalar_lea.vmem %s9, %s682
        %p684 = scmp.lt.s32.totalorder %s34, 1
        %s685 = scalar_select %p684, %s34, 1
        %s686 = smul.addr %s685, 8
        %s687 = smul.addr %s686, 4
        %s688 = scalar_lea.vmem %s11, %s687
        %p689 = scmp.lt.s32.totalorder %s34, 1
        %s690 = scalar_select %p689, %s34, 1
        %s691 = smul.addr %s690, 2
        %s692 = smul.addr %s691, 8
        %s693 = scalar_lea.vmem %s12, %s692
        %p694 = scmp.lt.s32.totalorder %s34, 1
        %s695 = scalar_select %p694, %s34, 1
        %s696 = scalar_lea.vmem %s13, %s695
        %s697 = smul.u32 2, %s33
        %p699 = scmp.eq.s32.totalorder %s34, 0
        // Predicated region
        $region97: #{tpu_custom_call.1} parent=75 // pred_check
          %p700 = pneg %p699
        $region98: #{tpu_custom_call.1} parent=75 // pred_check_branch
          %702 = sbr.rel (%p700) target = $region100
        $region99: #{tpu_custom_call.1} parent=75 // pred_region
          %v703 = vld [vmem:[%s3] sm:$0x1]
          %v704 = vld [vmem:[#allocation13] sm:$0x1]
          %v705 = vld [vmem:[%s5] sm:$0x1]
          %v706 = vld [vmem:[#allocation12] sm:$0xff]
          %v707 = vld [vmem:[#allocation12 + $0x8] sm:$0xff]
          %v708 = vld [vmem:[#allocation7] sm:$0xff]
          %v709 = vadd.f32 %v708, %v706
          %v711 = vlaneseq
          %v712 = vshrl.u32 %v711, 7
          %v713 = vsub.s32 0, %v712
          %v714 = vrot.slane %v703, %v713
          %v716 = vadd.f32 %v709, %v714
          %v717 = vld [vmem:[#allocation10] sm:$0xff]
          %v718 = vadd.f32 %v717, %v707
          %v719 = vadd.f32 %v718, %v714
          %vm720 = vcmask 261120
          %v721 = vsel %vm720, %v716, 0.0
          %722 = vadd.xlane.f32.xlu0 %v721
          %v723 = vpop.xlane.xlu0 %722
          %v724 = vrcp.pop 32.0
          %v725 = vmul.f32 %v723, %v724
          %v726 = vsub.f32 %v716, %v725
          %v727 = vmul.f32 %v726, %v726
          %v728 = vsel %vm720, %v727, 0.0
          %729 = vadd.xlane.f32.xlu0 %v728
          %v730 = vpop.xlane.xlu0 %729
          %v731 = vmul.f32 %v730, %v724
          %v732 = vadd.f32 %v731, 1e-12
          %v733 = vrsqrt.pop %v732
          %v734 = vmul.f32 %v726, %v733
          %v736 = vlaneseq
          %v737 = vshrl.u32 %v736, 7
          %v738 = vsub.s32 0, %v737
          %v739 = vrot.slane %v704, %v738
          %v741 = vmul.f32 %v734, %v739
          %v743 = vlaneseq
          %v744 = vshrl.u32 %v743, 7
          %v745 = vsub.s32 0, %v744
          %v746 = vrot.slane %v705, %v745
          %v748 = vadd.f32 %v741, %v746
          %749 = vst.msk [vmem:[#allocation2] sm:$0xff] %vm720, %v748
          %v750 = vsel %vm720, %v719, 0.0
          %751 = vadd.xlane.f32.xlu0 %v750
          %v752 = vpop.xlane.xlu0 %751
          %v753 = vmul.f32 %v752, %v724
          %v754 = vsub.f32 %v719, %v753
          %v755 = vmul.f32 %v754, %v754
          %v756 = vsel %vm720, %v755, 0.0
          %757 = vadd.xlane.f32.xlu0 %v756
          %v758 = vpop.xlane.xlu0 %757
          %v759 = vmul.f32 %v758, %v724
          %v760 = vadd.f32 %v759, 1e-12
          %v761 = vrsqrt.pop %v760
          %v762 = vmul.f32 %v754, %v761
          %v763 = vmul.f32 %v762, %v739
          %v764 = vadd.f32 %v763, %v746
          %765 = vst.msk [vmem:[#allocation2 + $0x8] sm:$0xff] %vm720, %v764
          %s766 = scalar_lea.vmem [#allocation7], 8
          %v767 = vld [vmem:[%s766] sm:$0xff]
          %v768 = vadd.f32 %v767, %v706
          %v769 = vadd.f32 %v768, %v714
          %s770 = scalar_lea.vmem [#allocation10], 8
          %v771 = vld [vmem:[%s770] sm:$0xff]
          %v772 = vadd.f32 %v771, %v707
          %v773 = vadd.f32 %v772, %v714
          %v774 = vsel %vm720, %v769, 0.0
          %775 = vadd.xlane.f32.xlu0 %v774
          %v776 = vpop.xlane.xlu0 %775
          %v777 = vmul.f32 %v776, %v724
          %v778 = vsub.f32 %v769, %v777
          %v779 = vmul.f32 %v778, %v778
          %v780 = vsel %vm720, %v779, 0.0
          %781 = vadd.xlane.f32.xlu0 %v780
          %v782 = vpop.xlane.xlu0 %781
          %v783 = vmul.f32 %v782, %v724
          %v784 = vadd.f32 %v783, 1e-12
          %v785 = vrsqrt.pop %v784
          %v786 = vmul.f32 %v778, %v785
          %v787 = vmul.f32 %v786, %v739
          %v788 = vadd.f32 %v787, %v746
          %789 = vst.msk [vmem:[#allocation2 + $0x10] sm:$0xff] %vm720, %v788
          %v790 = vsel %vm720, %v773, 0.0
          %791 = vadd.xlane.f32.xlu0 %v790
          %v792 = vpop.xlane.xlu0 %791
          %v793 = vmul.f32 %v792, %v724
          %v794 = vsub.f32 %v773, %v793
          %v795 = vmul.f32 %v794, %v794
          %v796 = vsel %vm720, %v795, 0.0
          %797 = vadd.xlane.f32.xlu0 %v796
          %v798 = vpop.xlane.xlu0 %797
          %v799 = vmul.f32 %v798, %v724
          %v800 = vadd.f32 %v799, 1e-12
          %v801 = vrsqrt.pop %v800
          %v802 = vmul.f32 %v794, %v801
          %v803 = vmul.f32 %v802, %v739
          %v804 = vadd.f32 %v803, %v746
          %805 = vst.msk [vmem:[#allocation2 + $0x18] sm:$0xff] %vm720, %v804
        $region100: #{tpu_custom_call.1} parent=75 // pred_fallthru
          _
        %v806 = vld [vmem:[#allocation2] sm:$0xff]
        %v807 = vld [vmem:[#allocation2 + $0x8] sm:$0xff]
        %v808 = vld [vmem:[#allocation2 + $0x10] sm:$0xff]
        %v809 = vld [vmem:[#allocation2 + $0x18] sm:$0xff]
        %v810 = vpack.c.bf16 %v807, %v806
        %v811 = vpack.c.bf16 %v809, %v808
        %v812 = vld [vmem:[%s668] sm:$0xf]
        %v813 = vld [vmem:[%s668 + $0x4] sm:$0xf]
        %v814 = vld [vmem:[%s668 + $0x8] sm:$0xf]
        %v815 = vld [vmem:[%s668 + $0xc] sm:$0xf]
        %v816 = vld [vmem:[%s693] sm:$0x1]
        %v817 = vlaneseq
        %v818 = vshrl.u32 %v817, 7
        %v819 = vsub.s32 0, %v818
        %v820 = vrot.slane %v816, %v819
        %v825 = vunpack.c.l.b16 %v812
        %v826 = vunpack.c.l.b16 %v813
        %v827 = vunpack.c.l.b16 %v814
        %v828 = vunpack.c.l.b16 %v815
        %v829 = vpack.c.b16 %v826, %v825
        %v830 = vpack.c.b16 %v828, %v827
        %vm833 = vcmask 261120
        %v835 = vsel %vm833, %v810, 0
        %v838 = vsel %vm833, %v811, 0
        %840 = vmatprep.subr.bf16.mxu0 0
        %841 = vmatpush1.bf16.msra.mxu0 %v829
        %842 = vmatprep.subr.bf16.mxu0 0
        %843 = vmatpush1.bf16.msra.mxu0 %v830
        %844 = vmatprep.subr.bf16.mxu0 0
        %845 = vmatpush1.bf16.msra.mxu0 0
        %846 = vmatprep.subr.bf16.mxu0 0
        %847 = vmatpush1.bf16.msra.mxu0 0
        %848 = vmatprep.subr.bf16.mxu0 0
        %849 = vmatpush1.bf16.msra.mxu0 0
        %850 = vmatprep.subr.bf16.mxu0 0
        %851 = vmatpush1.bf16.msra.mxu0 0
        %852 = vmatprep.subr.bf16.mxu0 0
        %853 = vmatpush1.bf16.msra.mxu0 0
        %854 = vmatprep.subr.bf16.mxu0 0
        %855 = vmatpush1.bf16.msra.mxu0 0
        %856 = vmatprep.subr.bf16.mxu0 0
        %857 = vmatpush1.bf16.msra.mxu0 0
        %858 = vmatprep.subr.bf16.mxu0 0
        %859 = vmatpush1.bf16.msra.mxu0 0
        %860 = vmatprep.subr.bf16.mxu0 0
        %861 = vmatpush1.bf16.msra.mxu0 0
        %862 = vmatprep.subr.bf16.mxu0 0
        %863 = vmatpush1.bf16.msra.mxu0 0
        %864 = vmatprep.subr.bf16.mxu0 0
        %865 = vmatpush1.bf16.msra.mxu0 0
        %866 = vmatprep.subr.bf16.mxu0 0
        %867 = vmatpush1.bf16.msra.mxu0 0
        %868 = vmatprep.subr.bf16.mxu0 0
        %869 = vmatpush1.bf16.msra.mxu0 0
        %870 = vmatprep.subr.bf16.mxu0 0
        %871 = vmatpush1.bf16.msra.mxu0 0
        %872 = vmatprep.mubr.bf16.mxu0 0
        %873 = vmatmul.mubr.bf16.gmra.mrb[0].mxu0 %v835
        %v874 = vpop.f32.mrb[0].mxu0
        %v875 = vadd.f32 %v820, %v874
        %v876 = vpop.f32.mrb[0].mxu0
        %v877 = vpop.f32.mrb[0].mxu0
        %v878 = vadd.f32 %v820, %v877
        %v879 = vpop.f32.mrb[0].mxu0
        %880 = vmatprep.mubr.bf16.mxu0 0
        %881 = vmatmul.mubr.bf16.gmra.mrb[0].mxu0 %v838
        %v882 = vpop.f32.mrb[0].mxu0
        %v883 = vadd.f32 %v820, %v882
        %v884 = vpop.f32.mrb[0].mxu0
        %v885 = vpop.f32.mrb[0].mxu0
        %v886 = vadd.f32 %v820, %v885
        %v887 = vpop.f32.mrb[0].mxu0
        %888 = vdwg.mxu0
        %v889 = vpack.c.bf16 %v878, %v875
        %v890 = vpack.c.bf16 %v886, %v883
        %891 = vst.msk [vmem:[#allocation3] sm:$0xff] %vm833, %v889
        %892 = vst.msk [vmem:[#allocation3 + $0x8] sm:$0xff] %vm833, %v890
        %v893 = vld [vmem:[%s673] sm:$0xf]
        %v894 = vld [vmem:[%s673 + $0x4] sm:$0xf]
        %v895 = vld [vmem:[%s673 + $0x8] sm:$0xf]
        %v896 = vld [vmem:[%s673 + $0xc] sm:$0xf]
        %v897 = vld [vmem:[%s693 + $0x1] sm:$0x1]
        %v898 = vlaneseq
        %v899 = vshrl.u32 %v898, 7
        %v900 = vsub.s32 0, %v899
        %v901 = vrot.slane %v897, %v900
        %v906 = vunpack.c.l.b16 %v893
        %v907 = vunpack.c.l.b16 %v894
        %v908 = vunpack.c.l.b16 %v895
        %v909 = vunpack.c.l.b16 %v896
        %v910 = vpack.c.b16 %v907, %v906
        %v911 = vpack.c.b16 %v909, %v908
        %914 = vmatprep.subr.bf16.mxu0 0
        %915 = vmatpush1.bf16.msra.mxu0 %v910
        %916 = vmatprep.subr.bf16.mxu0 0
        %917 = vmatpush1.bf16.msra.mxu0 %v911
        %918 = vmatprep.subr.bf16.mxu0 0
        %919 = vmatpush1.bf16.msra.mxu0 0
        %920 = vmatprep.subr.bf16.mxu0 0
        %921 = vmatpush1.bf16.msra.mxu0 0
        %922 = vmatprep.subr.bf16.mxu0 0
        %923 = vmatpush1.bf16.msra.mxu0 0
        %924 = vmatprep.subr.bf16.mxu0 0
        %925 = vmatpush1.bf16.msra.mxu0 0
        %926 = vmatprep.subr.bf16.mxu0 0
        %927 = vmatpush1.bf16.msra.mxu0 0
        %928 = vmatprep.subr.bf16.mxu0 0
        %929 = vmatpush1.bf16.msra.mxu0 0
        %930 = vmatprep.subr.bf16.mxu0 0
        %931 = vmatpush1.bf16.msra.mxu0 0
        %932 = vmatprep.subr.bf16.mxu0 0
        %933 = vmatpush1.bf16.msra.mxu0 0
        %934 = vmatprep.subr.bf16.mxu0 0
        %935 = vmatpush1.bf16.msra.mxu0 0
        %936 = vmatprep.subr.bf16.mxu0 0
        %937 = vmatpush1.bf16.msra.mxu0 0
        %938 = vmatprep.subr.bf16.mxu0 0
        %939 = vmatpush1.bf16.msra.mxu0 0
        %940 = vmatprep.subr.bf16.mxu0 0
        %941 = vmatpush1.bf16.msra.mxu0 0
        %942 = vmatprep.subr.bf16.mxu0 0
        %943 = vmatpush1.bf16.msra.mxu0 0
        %944 = vmatprep.subr.bf16.mxu0 0
        %945 = vmatpush1.bf16.msra.mxu0 0
        %946 = vmatprep.mubr.bf16.mxu0 0
        %947 = vmatmul.mubr.bf16.gmra.mrb[0].mxu0 %v835
        %v948 = vpop.f32.mrb[0].mxu0
        %v949 = vadd.f32 %v901, %v948
        %v950 = vpop.f32.mrb[0].mxu0
        %v951 = vpop.f32.mrb[0].mxu0
        %v952 = vadd.f32 %v901, %v951
        %v953 = vpop.f32.mrb[0].mxu0
        %954 = vmatprep.mubr.bf16.mxu0 0
        %955 = vmatmul.mubr.bf16.gmra.mrb[0].mxu0 %v838
        %v956 = vpop.f32.mrb[0].mxu0
        %v957 = vadd.f32 %v901, %v956
        %v958 = vpop.f32.mrb[0].mxu0
        %v959 = vpop.f32.mrb[0].mxu0
        %v960 = vadd.f32 %v901, %v959
        %v961 = vpop.f32.mrb[0].mxu0
        %962 = vdwg.mxu0
        %v963 = vpack.c.bf16 %v952, %v949
        %v964 = vpack.c.bf16 %v960, %v957
        %965 = vst.msk [vmem:[#allocation4] sm:$0xff] %vm833, %v963
        %966 = vst.msk [vmem:[#allocation4 + $0x8] sm:$0xff] %vm833, %v964
        %v967 = vld [vmem:[%s678] sm:$0xf]
        %v968 = vld [vmem:[%s678 + $0x4] sm:$0xf]
        %v969 = vld [vmem:[%s678 + $0x8] sm:$0xf]
        %v970 = vld [vmem:[%s678 + $0xc] sm:$0xf]
        %v971 = vld [vmem:[%s693 + $0x2] sm:$0x1]
        %v972 = vlaneseq
        %v973 = vshrl.u32 %v972, 7
        %v974 = vsub.s32 0, %v973
        %v975 = vrot.slane %v971, %v974
        %v980 = vunpack.c.l.b16 %v967
        %v981 = vunpack.c.l.b16 %v968
        %v982 = vunpack.c.l.b16 %v969
        %v983 = vunpack.c.l.b16 %v970
        %v984 = vpack.c.b16 %v981, %v980
        %v985 = vpack.c.b16 %v983, %v982
        %988 = vmatprep.subr.bf16.mxu0 0
        %989 = vmatpush1.bf16.msra.mxu0 %v984
        %990 = vmatprep.subr.bf16.mxu0 0
        %991 = vmatpush1.bf16.msra.mxu0 %v985
        %992 = vmatprep.subr.bf16.mxu0 0
        %993 = vmatpush1.bf16.msra.mxu0 0
        %994 = vmatprep.subr.bf16.mxu0 0
        %995 = vmatpush1.bf16.msra.mxu0 0
        %996 = vmatprep.subr.bf16.mxu0 0
        %997 = vmatpush1.bf16.msra.mxu0 0
        %998 = vmatprep.subr.bf16.mxu0 0
        %999 = vmatpush1.bf16.msra.mxu0 0
        %1000 = vmatprep.subr.bf16.mxu0 0
        %1001 = vmatpush1.bf16.msra.mxu0 0
        %1002 = vmatprep.subr.bf16.mxu0 0
        %1003 = vmatpush1.bf16.msra.mxu0 0
        %1004 = vmatprep.subr.bf16.mxu0 0
        %1005 = vmatpush1.bf16.msra.mxu0 0
        %1006 = vmatprep.subr.bf16.mxu0 0
        %1007 = vmatpush1.bf16.msra.mxu0 0
        %1008 = vmatprep.subr.bf16.mxu0 0
        %1009 = vmatpush1.bf16.msra.mxu0 0
        %1010 = vmatprep.subr.bf16.mxu0 0
        %1011 = vmatpush1.bf16.msra.mxu0 0
        %1012 = vmatprep.subr.bf16.mxu0 0
        %1013 = vmatpush1.bf16.msra.mxu0 0
        %1014 = vmatprep.subr.bf16.mxu0 0
        %1015 = vmatpush1.bf16.msra.mxu0 0
        %1016 = vmatprep.subr.bf16.mxu0 0
        %1017 = vmatpush1.bf16.msra.mxu0 0
        %1018 = vmatprep.subr.bf16.mxu0 0
        %1019 = vmatpush1.bf16.msra.mxu0 0
        %1020 = vmatprep.mubr.bf16.mxu0 0
        %1021 = vmatmul.mubr.bf16.gmra.mrb[0].mxu0 %v835
        %v1022 = vpop.f32.mrb[0].mxu0
        %v1023 = vadd.f32 %v975, %v1022
        %v1024 = vpop.f32.mrb[0].mxu0
        %v1025 = vpop.f32.mrb[0].mxu0
        %v1026 = vadd.f32 %v975, %v1025
        %v1027 = vpop.f32.mrb[0].mxu0
        %1028 = vmatprep.mubr.bf16.mxu0 0
        %1029 = vmatmul.mubr.bf16.gmra.mrb[0].mxu0 %v838
        %v1030 = vpop.f32.mrb[0].mxu0
        %v1031 = vadd.f32 %v975, %v1030
        %v1032 = vpop.f32.mrb[0].mxu0
        %v1033 = vpop.f32.mrb[0].mxu0
        %v1034 = vadd.f32 %v975, %v1033
        %v1035 = vpop.f32.mrb[0].mxu0
        %1036 = vdwg.mxu0
        %v1037 = vpack.c.bf16 %v1026, %v1023
        %v1038 = vpack.c.bf16 %v1034, %v1031
        %1039 = vst.msk [vmem:[#allocation5] sm:$0xff] %vm833, %v1037
        %1040 = vst.msk [vmem:[#allocation5 + $0x8] sm:$0xff] %vm833, %v1038
        %v1041 = vld [vmem:[#allocation3] sm:$0xff]
        %v1042 = vld [vmem:[#allocation4] sm:$0xff]
        %v1043 = vld [vmem:[#allocation5] sm:$0xff]
        %vm1044 = vcmask 130048
        %v1046 = vsel %vm1044, %v1041, 0
        %v1049 = vsel %vm1044, %v1042, 0
        %1051 = vmatprep.subr.bf16.mxu0 0
        %1052 = vmatpush1.bf16.xpose.msra.mxu0 %v1049
        %1053 = vmatprep.subr.bf16.mxu0 0
        %1054 = vmatpush1.bf16.xpose.msra.mxu0 0
        %1055 = vmatprep.subr.bf16.mxu0 0
        %1056 = vmatpush1.bf16.xpose.msra.mxu0 0
        %1057 = vmatprep.subr.bf16.mxu0 0
        %1058 = vmatpush1.bf16.xpose.msra.mxu0 0
        %1059 = vmatprep.subr.bf16.mxu0 0
        %1060 = vmatpush1.bf16.xpose.msra.mxu0 0
        %1061 = vmatprep.subr.bf16.mxu0 0
        %1062 = vmatpush1.bf16.xpose.msra.mxu0 0
        %1063 = vmatprep.subr.bf16.mxu0 0
        %1064 = vmatpush1.bf16.xpose.msra.mxu0 0
        %1065 = vmatprep.subr.bf16.mxu0 0
        %1066 = vmatpush1.bf16.xpose.msra.mxu0 0
        %1067 = vmatprep.subr.bf16.mxu0 0
        %1068 = vmatpush1.bf16.xpose.msra.mxu0 0
        %1069 = vmatprep.subr.bf16.mxu0 0
        %1070 = vmatpush1.bf16.xpose.msra.mxu0 0
        %1071 = vmatprep.subr.bf16.mxu0 0
        %1072 = vmatpush1.bf16.xpose.msra.mxu0 0
        %1073 = vmatprep.subr.bf16.mxu0 0
        %1074 = vmatpush1.bf16.xpose.msra.mxu0 0
        %1075 = vmatprep.subr.bf16.mxu0 0
        %1076 = vmatpush1.bf16.xpose.msra.mxu0 0
        %1077 = vmatprep.subr.bf16.mxu0 0
        %1078 = vmatpush1.bf16.xpose.msra.mxu0 0
        %1079 = vmatprep.subr.bf16.mxu0 0
        %1080 = vmatpush1.bf16.xpose.msra.mxu0 0
        %1081 = vmatprep.subr.bf16.mxu0 0
        %1082 = vmatpush1.bf16.xpose.msra.mxu0 0
        %1083 = vmatprep.mubr.bf16.mxu0 0
        %1084 = vmatmul.mubr.bf16.gmra.mrb[0].mxu0 %v1046
        %v1085 = vpop.f32.mrb[0].mxu0
        %v1086 = vadd.f32 0.0, %v1085
        %v1087 = vpop.f32.mrb[0].mxu0
        %v1088 = vpop.f32.mrb[0].mxu0
        %v1089 = vadd.f32 0.0, %v1088
        %v1090 = vpop.f32.mrb[0].mxu0
        %1091 = vdwg.mxu0
        %v1092 = vsel %vm1044, %v1086, -inf
        %1093 = vmax.xlane.f32.xlu0 %v1092
        %v1094 = vpop.xlane.xlu0 %1093
        %v1095 = vsel %vm1044, %v1089, -inf
        %1096 = vmax.xlane.f32.xlu0 %v1095
        %v1097 = vpop.xlane.xlu0 %1096
        %v1098 = vsub.f32 %v1086, %v1094
        %v1099 = vsub.f32 %v1089, %v1097
        %v1100 = vmul.f32 %v1098, 1.442695
        %v1101 = vpow.pop %v1100
        %v1102 = vmul.f32 %v1099, 1.442695
        %v1103 = vpow.pop %v1102
        %v1104 = vsel %vm1044, %v1101, 0.0
        %1105 = vadd.xlane.f32.xlu0 %v1104
        %v1106 = vpop.xlane.xlu0 %1105
        %v1107 = vsel %vm1044, %v1103, 0.0
        %1108 = vadd.xlane.f32.xlu0 %v1107
        %v1109 = vpop.xlane.xlu0 %1108
        %v1110 = vrcp.pop %v1106
        %v1111 = vrcp.pop %v1109
        %v1112 = vmul.f32 %v1101, %v1110
        %v1113 = vmul.f32 %v1103, %v1111
        %v1114 = vpack.c.bf16 %v1113, %v1112
        %v1116 = vsel %vm1044, %v1114, 0
        %1118 = vmatprep.subr.bf16.mxu0 0
        %1119 = vmatpush1.bf16.msra.mxu0 %v1043
        %1120 = vmatprep.subr.bf16.mxu0 0
        %1121 = vmatpush1.bf16.msra.mxu0 0
        %1122 = vmatprep.subr.bf16.mxu0 0
        %1123 = vmatpush1.bf16.msra.mxu0 0
        %1124 = vmatprep.subr.bf16.mxu0 0
        %1125 = vmatpush1.bf16.msra.mxu0 0
        %1126 = vmatprep.subr.bf16.mxu0 0
        %1127 = vmatpush1.bf16.msra.mxu0 0
        %1128 = vmatprep.subr.bf16.mxu0 0
        %1129 = vmatpush1.bf16.msra.mxu0 0
        %1130 = vmatprep.subr.bf16.mxu0 0
        %1131 = vmatpush1.bf16.msra.mxu0 0
        %1132 = vmatprep.subr.bf16.mxu0 0
        %1133 = vmatpush1.bf16.msra.mxu0 0
        %1134 = vmatprep.subr.bf16.mxu0 0
        %1135 = vmatpush1.bf16.msra.mxu0 0
        %1136 = vmatprep.subr.bf16.mxu0 0
        %1137 = vmatpush1.bf16.msra.mxu0 0
        %1138 = vmatprep.subr.bf16.mxu0 0
        %1139 = vmatpush1.bf16.msra.mxu0 0
        %1140 = vmatprep.subr.bf16.mxu0 0
        %1141 = vmatpush1.bf16.msra.mxu0 0
        %1142 = vmatprep.subr.bf16.mxu0 0
        %1143 = vmatpush1.bf16.msra.mxu0 0
        %1144 = vmatprep.subr.bf16.mxu0 0
        %1145 = vmatpush1.bf16.msra.mxu0 0
        %1146 = vmatprep.subr.bf16.mxu0 0
        %1147 = vmatpush1.bf16.msra.mxu0 0
        %1148 = vmatprep.subr.bf16.mxu0 0
        %1149 = vmatpush1.bf16.msra.mxu0 0
        %1150 = vmatprep.mubr.bf16.mxu0 0
        %1151 = vmatmul.mubr.bf16.gmra.mrb[0].mxu0 %v1116
        %v1152 = vpop.f32.mrb[0].mxu0
        %v1153 = vadd.f32 0.0, %v1152
        %v1154 = vpop.f32.mrb[0].mxu0
        %v1155 = vpop.f32.mrb[0].mxu0
        %v1156 = vadd.f32 0.0, %v1155
        %v1157 = vpop.f32.mrb[0].mxu0
        %1158 = vdwg.mxu0
        %v1159 = vpack.c.bf16 %v1156, %v1153
        %1160 = vst.msk [vmem:[#allocation6] sm:$0xff] %vm1044, %v1159
        %v1161 = vld [vmem:[#allocation3] sm:$0xff]
        %v1162 = vld [vmem:[#allocation4] sm:$0xff]
        %v1163 = vld [vmem:[#allocation5] sm:$0xff]
        %1165 = vrot.lane.b32.xlu0 %v1161, 112
        %v1166 = vpop.permute.xlu0 %1165
        %1168 = vrot.lane.b32.xlu0 %v1162, 112
        %v1169 = vpop.permute.xlu0 %1168
        %v1171 = vsel %vm1044, %v1166, 0
        %v1174 = vsel %vm1044, %v1169, 0
        %1176 = vmatprep.subr.bf16.mxu0 0
        %1177 = vmatpush1.bf16.xpose.msra.mxu0 %v1174
        %1178 = vmatprep.subr.bf16.mxu0 0
        %1179 = vmatpush1.bf16.xpose.msra.mxu0 0
        %1180 = vmatprep.subr.bf16.mxu0 0
        %1181 = vmatpush1.bf16.xpose.msra.mxu0 0
        %1182 = vmatprep.subr.bf16.mxu0 0
        %1183 = vmatpush1.bf16.xpose.msra.mxu0 0
        %1184 = vmatprep.subr.bf16.mxu0 0
        %1185 = vmatpush1.bf16.xpose.msra.mxu0 0
        %1186 = vmatprep.subr.bf16.mxu0 0
        %1187 = vmatpush1.bf16.xpose.msra.mxu0 0
        %1188 = vmatprep.subr.bf16.mxu0 0
        %1189 = vmatpush1.bf16.xpose.msra.mxu0 0
        %1190 = vmatprep.subr.bf16.mxu0 0
        %1191 = vmatpush1.bf16.xpose.msra.mxu0 0
        %1192 = vmatprep.subr.bf16.mxu0 0
        %1193 = vmatpush1.bf16.xpose.msra.mxu0 0
        %1194 = vmatprep.subr.bf16.mxu0 0
        %1195 = vmatpush1.bf16.xpose.msra.mxu0 0
        %1196 = vmatprep.subr.bf16.mxu0 0
        %1197 = vmatpush1.bf16.xpose.msra.mxu0 0
        %1198 = vmatprep.subr.bf16.mxu0 0
        %1199 = vmatpush1.bf16.xpose.msra.mxu0 0
        %1200 = vmatprep.subr.bf16.mxu0 0
        %1201 = vmatpush1.bf16.xpose.msra.mxu0 0
        %1202 = vmatprep.subr.bf16.mxu0 0
        %1203 = vmatpush1.bf16.xpose.msra.mxu0 0
        %1204 = vmatprep.subr.bf16.mxu0 0
        %1205 = vmatpush1.bf16.xpose.msra.mxu0 0
        %1206 = vmatprep.subr.bf16.mxu0 0
        %1207 = vmatpush1.bf16.xpose.msra.mxu0 0
        %1208 = vmatprep.mubr.bf16.mxu0 0
        %1209 = vmatmul.mubr.bf16.gmra.mrb[0].mxu0 %v1171
        %v1210 = vpop.f32.mrb[0].mxu0
        %v1211 = vadd.f32 0.0, %v1210
        %v1212 = vpop.f32.mrb[0].mxu0
        %v1213 = vpop.f32.mrb[0].mxu0
        %v1214 = vadd.f32 0.0, %v1213
        %v1215 = vpop.f32.mrb[0].mxu0
        %1216 = vdwg.mxu0
        %v1217 = vsel %vm1044, %v1211, -inf
        %1218 = vmax.xlane.f32.xlu0 %v1217
        %v1219 = vpop.xlane.xlu0 %1218
        %v1220 = vsel %vm1044, %v1214, -inf
        %1221 = vmax.xlane.f32.xlu0 %v1220
        %v1222 = vpop.xlane.xlu0 %1221
        %v1223 = vsub.f32 %v1211, %v1219
        %v1224 = vsub.f32 %v1214, %v1222
        %v1225 = vmul.f32 %v1223, 1.442695
        %v1226 = vpow.pop %v1225
        %v1227 = vmul.f32 %v1224, 1.442695
        %v1228 = vpow.pop %v1227
        %v1229 = vsel %vm1044, %v1226, 0.0
        %1230 = vadd.xlane.f32.xlu0 %v1229
        %v1231 = vpop.xlane.xlu0 %1230
        %v1232 = vsel %vm1044, %v1228, 0.0
        %1233 = vadd.xlane.f32.xlu0 %v1232
        %v1234 = vpop.xlane.xlu0 %1233
        %v1235 = vrcp.pop %v1231
        %v1236 = vrcp.pop %v1234
        %v1237 = vmul.f32 %v1226, %v1235
        %v1238 = vmul.f32 %v1228, %v1236
        %v1239 = vpack.c.bf16 %v1238, %v1237
        %1241 = vrot.lane.b32.xlu0 %v1163, 112
        %v1242 = vpop.permute.xlu0 %1241
        %v1245 = vsel %vm1044, %v1239, 0
        %1247 = vmatprep.subr.bf16.mxu0 0
        %1248 = vmatpush1.bf16.msra.mxu0 %v1242
        %1249 = vmatprep.subr.bf16.mxu0 0
        %1250 = vmatpush1.bf16.msra.mxu0 0
        %1251 = vmatprep.subr.bf16.mxu0 0
        %1252 = vmatpush1.bf16.msra.mxu0 0
        %1253 = vmatprep.subr.bf16.mxu0 0
        %1254 = vmatpush1.bf16.msra.mxu0 0
        %1255 = vmatprep.subr.bf16.mxu0 0
        %1256 = vmatpush1.bf16.msra.mxu0 0
        %1257 = vmatprep.subr.bf16.mxu0 0
        %1258 = vmatpush1.bf16.msra.mxu0 0
        %1259 = vmatprep.subr.bf16.mxu0 0
        %1260 = vmatpush1.bf16.msra.mxu0 0
        %1261 = vmatprep.subr.bf16.mxu0 0
        %1262 = vmatpush1.bf16.msra.mxu0 0
        %1263 = vmatprep.subr.bf16.mxu0 0
        %1264 = vmatpush1.bf16.msra.mxu0 0
        %1265 = vmatprep.subr.bf16.mxu0 0
        %1266 = vmatpush1.bf16.msra.mxu0 0
        %1267 = vmatprep.subr.bf16.mxu0 0
        %1268 = vmatpush1.bf16.msra.mxu0 0
        %1269 = vmatprep.subr.bf16.mxu0 0
        %1270 = vmatpush1.bf16.msra.mxu0 0
        %1271 = vmatprep.subr.bf16.mxu0 0
        %1272 = vmatpush1.bf16.msra.mxu0 0
        %1273 = vmatprep.subr.bf16.mxu0 0
        %1274 = vmatpush1.bf16.msra.mxu0 0
        %1275 = vmatprep.subr.bf16.mxu0 0
        %1276 = vmatpush1.bf16.msra.mxu0 0
        %1277 = vmatprep.subr.bf16.mxu0 0
        %1278 = vmatpush1.bf16.msra.mxu0 0
        %1279 = vmatprep.mubr.bf16.mxu0 0
        %1280 = vmatmul.mubr.bf16.gmra.mrb[0].mxu0 %v1245
        %v1281 = vpop.f32.mrb[0].mxu0
        %v1282 = vadd.f32 0.0, %v1281
        %v1283 = vpop.f32.mrb[0].mxu0
        %v1284 = vpop.f32.mrb[0].mxu0
        %v1285 = vadd.f32 0.0, %v1284
        %v1286 = vpop.f32.mrb[0].mxu0
        %1287 = vdwg.mxu0
        %v1288 = vpack.c.bf16 %v1285, %v1282
        %1290 = vrot.lane.b32.xlu0 %v1288, 16
        %v1291 = vpop.permute.xlu0 %1290
        %vm1293 = vcmask 261248
        %1294 = vst.msk [vmem:[#allocation6] sm:$0xff] %vm1293, %v1291
        %v1295 = vld [vmem:[#allocation3 + $0x8] sm:$0xff]
        %v1296 = vld [vmem:[#allocation4 + $0x8] sm:$0xff]
        %v1297 = vld [vmem:[#allocation5 + $0x8] sm:$0xff]
        %v1299 = vsel %vm1044, %v1295, 0
        %v1302 = vsel %vm1044, %v1296, 0
        %1304 = vmatprep.subr.bf16.mxu0 0
        %1305 = vmatpush1.bf16.xpose.msra.mxu0 %v1302
        %1306 = vmatprep.subr.bf16.mxu0 0
        %1307 = vmatpush1.bf16.xpose.msra.mxu0 0
        %1308 = vmatprep.subr.bf16.mxu0 0
        %1309 = vmatpush1.bf16.xpose.msra.mxu0 0
        %1310 = vmatprep.subr.bf16.mxu0 0
        %1311 = vmatpush1.bf16.xpose.msra.mxu0 0
        %1312 = vmatprep.subr.bf16.mxu0 0
        %1313 = vmatpush1.bf16.xpose.msra.mxu0 0
        %1314 = vmatprep.subr.bf16.mxu0 0
        %1315 = vmatpush1.bf16.xpose.msra.mxu0 0
        %1316 = vmatprep.subr.bf16.mxu0 0
        %1317 = vmatpush1.bf16.xpose.msra.mxu0 0
        %1318 = vmatprep.subr.bf16.mxu0 0
        %1319 = vmatpush1.bf16.xpose.msra.mxu0 0
        %1320 = vmatprep.subr.bf16.mxu0 0
        %1321 = vmatpush1.bf16.xpose.msra.mxu0 0
        %1322 = vmatprep.subr.bf16.mxu0 0
        %1323 = vmatpush1.bf16.xpose.msra.mxu0 0
        %1324 = vmatprep.subr.bf16.mxu0 0
        %1325 = vmatpush1.bf16.xpose.msra.mxu0 0
        %1326 = vmatprep.subr.bf16.mxu0 0
        %1327 = vmatpush1.bf16.xpose.msra.mxu0 0
        %1328 = vmatprep.subr.bf16.mxu0 0
        %1329 = vmatpush1.bf16.xpose.msra.mxu0 0
        %1330 = vmatprep.subr.bf16.mxu0 0
        %1331 = vmatpush1.bf16.xpose.msra.mxu0 0
        %1332 = vmatprep.subr.bf16.mxu0 0
        %1333 = vmatpush1.bf16.xpose.msra.mxu0 0
        %1334 = vmatprep.subr.bf16.mxu0 0
        %1335 = vmatpush1.bf16.xpose.msra.mxu0 0
        %1336 = vmatprep.mubr.bf16.mxu0 0
        %1337 = vmatmul.mubr.bf16.gmra.mrb[0].mxu0 %v1299
        %v1338 = vpop.f32.mrb[0].mxu0
        %v1339 = vadd.f32 0.0, %v1338
        %v1340 = vpop.f32.mrb[0].mxu0
        %v1341 = vpop.f32.mrb[0].mxu0
        %v1342 = vadd.f32 0.0, %v1341
        %v1343 = vpop.f32.mrb[0].mxu0
        %1344 = vdwg.mxu0
        %v1345 = vsel %vm1044, %v1339, -inf
        %1346 = vmax.xlane.f32.xlu0 %v1345
        %v1347 = vpop.xlane.xlu0 %1346
        %v1348 = vsel %vm1044, %v1342, -inf
        %1349 = vmax.xlane.f32.xlu0 %v1348
        %v1350 = vpop.xlane.xlu0 %1349
        %v1351 = vsub.f32 %v1339, %v1347
        %v1352 = vsub.f32 %v1342, %v1350
        %v1353 = vmul.f32 %v1351, 1.442695
        %v1354 = vpow.pop %v1353
        %v1355 = vmul.f32 %v1352, 1.442695
        %v1356 = vpow.pop %v1355
        %v1357 = vsel %vm1044, %v1354, 0.0
        %1358 = vadd.xlane.f32.xlu0 %v1357
        %v1359 = vpop.xlane.xlu0 %1358
        %v1360 = vsel %vm1044, %v1356, 0.0
        %1361 = vadd.xlane.f32.xlu0 %v1360
        %v1362 = vpop.xlane.xlu0 %1361
        %v1363 = vrcp.pop %v1359
        %v1364 = vrcp.pop %v1362
        %v1365 = vmul.f32 %v1354, %v1363
        %v1366 = vmul.f32 %v1356, %v1364
        %v1367 = vpack.c.bf16 %v1366, %v1365
        %v1369 = vsel %vm1044, %v1367, 0
        %1371 = vmatprep.subr.bf16.mxu0 0
        %1372 = vmatpush1.bf16.msra.mxu0 %v1297
        %1373 = vmatprep.subr.bf16.mxu0 0
        %1374 = vmatpush1.bf16.msra.mxu0 0
        %1375 = vmatprep.subr.bf16.mxu0 0
        %1376 = vmatpush1.bf16.msra.mxu0 0
        %1377 = vmatprep.subr.bf16.mxu0 0
        %1378 = vmatpush1.bf16.msra.mxu0 0
        %1379 = vmatprep.subr.bf16.mxu0 0
        %1380 = vmatpush1.bf16.msra.mxu0 0
        %1381 = vmatprep.subr.bf16.mxu0 0
        %1382 = vmatpush1.bf16.msra.mxu0 0
        %1383 = vmatprep.subr.bf16.mxu0 0
        %1384 = vmatpush1.bf16.msra.mxu0 0
        %1385 = vmatprep.subr.bf16.mxu0 0
        %1386 = vmatpush1.bf16.msra.mxu0 0
        %1387 = vmatprep.subr.bf16.mxu0 0
        %1388 = vmatpush1.bf16.msra.mxu0 0
        %1389 = vmatprep.subr.bf16.mxu0 0
        %1390 = vmatpush1.bf16.msra.mxu0 0
        %1391 = vmatprep.subr.bf16.mxu0 0
        %1392 = vmatpush1.bf16.msra.mxu0 0
        %1393 = vmatprep.subr.bf16.mxu0 0
        %1394 = vmatpush1.bf16.msra.mxu0 0
        %1395 = vmatprep.subr.bf16.mxu0 0
        %1396 = vmatpush1.bf16.msra.mxu0 0
        %1397 = vmatprep.subr.bf16.mxu0 0
        %1398 = vmatpush1.bf16.msra.mxu0 0
        %1399 = vmatprep.subr.bf16.mxu0 0
        %1400 = vmatpush1.bf16.msra.mxu0 0
        %1401 = vmatprep.subr.bf16.mxu0 0
        %1402 = vmatpush1.bf16.msra.mxu0 0
        %1403 = vmatprep.mubr.bf16.mxu0 0
        %1404 = vmatmul.mubr.bf16.gmra.mrb[0].mxu0 %v1369
        %v1405 = vpop.f32.mrb[0].mxu0
        %v1406 = vadd.f32 0.0, %v1405
        %v1407 = vpop.f32.mrb[0].mxu0
        %v1408 = vpop.f32.mrb[0].mxu0
        %v1409 = vadd.f32 0.0, %v1408
        %v1410 = vpop.f32.mrb[0].mxu0
        %1411 = vdwg.mxu0
        %v1412 = vpack.c.bf16 %v1409, %v1406
        %1413 = vst.msk [vmem:[#allocation6 + $0x8] sm:$0xff] %vm1044, %v1412
        %v1414 = vld [vmem:[#allocation3 + $0x8] sm:$0xff]
        %v1415 = vld [vmem:[#allocation4 + $0x8] sm:$0xff]
        %v1416 = vld [vmem:[#allocation5 + $0x8] sm:$0xff]
        %1418 = vrot.lane.b32.xlu0 %v1414, 112
        %v1419 = vpop.permute.xlu0 %1418
        %1421 = vrot.lane.b32.xlu0 %v1415, 112
        %v1422 = vpop.permute.xlu0 %1421
        %v1424 = vsel %vm1044, %v1419, 0
        %v1427 = vsel %vm1044, %v1422, 0
        %1429 = vmatprep.subr.bf16.mxu0 0
        %1430 = vmatpush1.bf16.xpose.msra.mxu0 %v1427
        %1431 = vmatprep.subr.bf16.mxu0 0
        %1432 = vmatpush1.bf16.xpose.msra.mxu0 0
        %1433 = vmatprep.subr.bf16.mxu0 0
        %1434 = vmatpush1.bf16.xpose.msra.mxu0 0
        %1435 = vmatprep.subr.bf16.mxu0 0
        %1436 = vmatpush1.bf16.xpose.msra.mxu0 0
        %1437 = vmatprep.subr.bf16.mxu0 0
        %1438 = vmatpush1.bf16.xpose.msra.mxu0 0
        %1439 = vmatprep.subr.bf16.mxu0 0
        %1440 = vmatpush1.bf16.xpose.msra.mxu0 0
        %1441 = vmatprep.subr.bf16.mxu0 0
        %1442 = vmatpush1.bf16.xpose.msra.mxu0 0
        %1443 = vmatprep.subr.bf16.mxu0 0
        %1444 = vmatpush1.bf16.xpose.msra.mxu0 0
        %1445 = vmatprep.subr.bf16.mxu0 0
        %1446 = vmatpush1.bf16.xpose.msra.mxu0 0
        %1447 = vmatprep.subr.bf16.mxu0 0
        %1448 = vmatpush1.bf16.xpose.msra.mxu0 0
        %1449 = vmatprep.subr.bf16.mxu0 0
        %1450 = vmatpush1.bf16.xpose.msra.mxu0 0
        %1451 = vmatprep.subr.bf16.mxu0 0
        %1452 = vmatpush1.bf16.xpose.msra.mxu0 0
        %1453 = vmatprep.subr.bf16.mxu0 0
        %1454 = vmatpush1.bf16.xpose.msra.mxu0 0
        %1455 = vmatprep.subr.bf16.mxu0 0
        %1456 = vmatpush1.bf16.xpose.msra.mxu0 0
        %1457 = vmatprep.subr.bf16.mxu0 0
        %1458 = vmatpush1.bf16.xpose.msra.mxu0 0
        %1459 = vmatprep.subr.bf16.mxu0 0
        %1460 = vmatpush1.bf16.xpose.msra.mxu0 0
        %1461 = vmatprep.mubr.bf16.mxu0 0
        %1462 = vmatmul.mubr.bf16.gmra.mrb[0].mxu0 %v1424
        %v1463 = vpop.f32.mrb[0].mxu0
        %v1464 = vadd.f32 0.0, %v1463
        %v1465 = vpop.f32.mrb[0].mxu0
        %v1466 = vpop.f32.mrb[0].mxu0
        %v1467 = vadd.f32 0.0, %v1466
        %v1468 = vpop.f32.mrb[0].mxu0
        %1469 = vdwg.mxu0
        %v1470 = vsel %vm1044, %v1464, -inf
        %1471 = vmax.xlane.f32.xlu0 %v1470
        %v1472 = vpop.xlane.xlu0 %1471
        %v1473 = vsel %vm1044, %v1467, -inf
        %1474 = vmax.xlane.f32.xlu0 %v1473
        %v1475 = vpop.xlane.xlu0 %1474
        %v1476 = vsub.f32 %v1464, %v1472
        %v1477 = vsub.f32 %v1467, %v1475
        %v1478 = vmul.f32 %v1476, 1.442695
        %v1479 = vpow.pop %v1478
        %v1480 = vmul.f32 %v1477, 1.442695
        %v1481 = vpow.pop %v1480
        %v1482 = vsel %vm1044, %v1479, 0.0
        %1483 = vadd.xlane.f32.xlu0 %v1482
        %v1484 = vpop.xlane.xlu0 %1483
        %v1485 = vsel %vm1044, %v1481, 0.0
        %1486 = vadd.xlane.f32.xlu0 %v1485
        %v1487 = vpop.xlane.xlu0 %1486
        %v1488 = vrcp.pop %v1484
        %v1489 = vrcp.pop %v1487
        %v1490 = vmul.f32 %v1479, %v1488
        %v1491 = vmul.f32 %v1481, %v1489
        %v1492 = vpack.c.bf16 %v1491, %v1490
        %1494 = vrot.lane.b32.xlu0 %v1416, 112
        %v1495 = vpop.permute.xlu0 %1494
        %v1498 = vsel %vm1044, %v1492, 0
        %1500 = vmatprep.subr.bf16.mxu0 0
        %1501 = vmatpush1.bf16.msra.mxu0 %v1495
        %1502 = vmatprep.subr.bf16.mxu0 0
        %1503 = vmatpush1.bf16.msra.mxu0 0
        %1504 = vmatprep.subr.bf16.mxu0 0
        %1505 = vmatpush1.bf16.msra.mxu0 0
        %1506 = vmatprep.subr.bf16.mxu0 0
        %1507 = vmatpush1.bf16.msra.mxu0 0
        %1508 = vmatprep.subr.bf16.mxu0 0
        %1509 = vmatpush1.bf16.msra.mxu0 0
        %1510 = vmatprep.subr.bf16.mxu0 0
        %1511 = vmatpush1.bf16.msra.mxu0 0
        %1512 = vmatprep.subr.bf16.mxu0 0
        %1513 = vmatpush1.bf16.msra.mxu0 0
        %1514 = vmatprep.subr.bf16.mxu0 0
        %1515 = vmatpush1.bf16.msra.mxu0 0
        %1516 = vmatprep.subr.bf16.mxu0 0
        %1517 = vmatpush1.bf16.msra.mxu0 0
        %1518 = vmatprep.subr.bf16.mxu0 0
        %1519 = vmatpush1.bf16.msra.mxu0 0
        %1520 = vmatprep.subr.bf16.mxu0 0
        %1521 = vmatpush1.bf16.msra.mxu0 0
        %1522 = vmatprep.subr.bf16.mxu0 0
        %1523 = vmatpush1.bf16.msra.mxu0 0
        %1524 = vmatprep.subr.bf16.mxu0 0
        %1525 = vmatpush1.bf16.msra.mxu0 0
        %1526 = vmatprep.subr.bf16.mxu0 0
        %1527 = vmatpush1.bf16.msra.mxu0 0
        %1528 = vmatprep.subr.bf16.mxu0 0
        %1529 = vmatpush1.bf16.msra.mxu0 0
        %1530 = vmatprep.subr.bf16.mxu0 0
        %1531 = vmatpush1.bf16.msra.mxu0 0
        %1532 = vmatprep.mubr.bf16.mxu0 0
        %1533 = vmatmul.mubr.bf16.gmra.mrb[0].mxu0 %v1498
        %v1534 = vpop.f32.mrb[0].mxu0
        %v1535 = vadd.f32 0.0, %v1534
        %v1536 = vpop.f32.mrb[0].mxu0
        %v1537 = vpop.f32.mrb[0].mxu0
        %v1538 = vadd.f32 0.0, %v1537
        %v1539 = vpop.f32.mrb[0].mxu0
        %1540 = vdwg.mxu0
        %v1541 = vpack.c.bf16 %v1538, %v1535
        %1543 = vrot.lane.b32.xlu0 %v1541, 16
        %v1544 = vpop.permute.xlu0 %1543
        %1546 = vst.msk [vmem:[#allocation6 + $0x8] sm:$0xff] %vm1293, %v1544
        %v1547 = vld [vmem:[#allocation6] sm:$0xff]
        %v1548 = vld [vmem:[#allocation6 + $0x8] sm:$0xff]
        %v1549 = vld [vmem:[%s683] sm:$0xf]
        %v1550 = vld [vmem:[%s683 + $0x4] sm:$0xf]
        %v1551 = vld [vmem:[%s683 + $0x8] sm:$0xf]
        %v1552 = vld [vmem:[%s683 + $0xc] sm:$0xf]
        %v1553 = vld [vmem:[%s693 + $0x3] sm:$0x1]
        %v1554 = vlaneseq
        %v1555 = vshrl.u32 %v1554, 7
        %v1556 = vsub.s32 0, %v1555
        %v1557 = vrot.slane %v1553, %v1556
        %v1562 = vunpack.c.l.b16 %v1549
        %v1563 = vunpack.c.l.b16 %v1550
        %v1564 = vunpack.c.l.b16 %v1551
        %v1565 = vunpack.c.l.b16 %v1552
        %v1566 = vpack.c.b16 %v1563, %v1562
        %v1567 = vpack.c.b16 %v1565, %v1564
        %v1571 = vsel %vm833, %v1547, 0
        %v1574 = vsel %vm833, %v1548, 0
        %1576 = vmatprep.subr.bf16.mxu0 0
        %1577 = vmatpush1.bf16.msra.mxu0 %v1566
        %1578 = vmatprep.subr.bf16.mxu0 0
        %1579 = vmatpush1.bf16.msra.mxu0 %v1567
        %1580 = vmatprep.subr.bf16.mxu0 0
        %1581 = vmatpush1.bf16.msra.mxu0 0
        %1582 = vmatprep.subr.bf16.mxu0 0
        %1583 = vmatpush1.bf16.msra.mxu0 0
        %1584 = vmatprep.subr.bf16.mxu0 0
        %1585 = vmatpush1.bf16.msra.mxu0 0
        %1586 = vmatprep.subr.bf16.mxu0 0
        %1587 = vmatpush1.bf16.msra.mxu0 0
        %1588 = vmatprep.subr.bf16.mxu0 0
        %1589 = vmatpush1.bf16.msra.mxu0 0
        %1590 = vmatprep.subr.bf16.mxu0 0
        %1591 = vmatpush1.bf16.msra.mxu0 0
        %1592 = vmatprep.subr.bf16.mxu0 0
        %1593 = vmatpush1.bf16.msra.mxu0 0
        %1594 = vmatprep.subr.bf16.mxu0 0
        %1595 = vmatpush1.bf16.msra.mxu0 0
        %1596 = vmatprep.subr.bf16.mxu0 0
        %1597 = vmatpush1.bf16.msra.mxu0 0
        %1598 = vmatprep.subr.bf16.mxu0 0
        %1599 = vmatpush1.bf16.msra.mxu0 0
        %1600 = vmatprep.subr.bf16.mxu0 0
        %1601 = vmatpush1.bf16.msra.mxu0 0
        %1602 = vmatprep.subr.bf16.mxu0 0
        %1603 = vmatpush1.bf16.msra.mxu0 0
        %1604 = vmatprep.subr.bf16.mxu0 0
        %1605 = vmatpush1.bf16.msra.mxu0 0
        %1606 = vmatprep.subr.bf16.mxu0 0
        %1607 = vmatpush1.bf16.msra.mxu0 0
        %1608 = vmatprep.mubr.bf16.mxu0 0
        %1609 = vmatmul.mubr.bf16.gmra.mrb[0].mxu0 %v1571
        %v1610 = vpop.f32.mrb[0].mxu0
        %v1611 = vadd.f32 %v1557, %v1610
        %v1612 = vpop.f32.mrb[0].mxu0
        %v1613 = vpop.f32.mrb[0].mxu0
        %v1614 = vadd.f32 %v1557, %v1613
        %v1615 = vpop.f32.mrb[0].mxu0
        %1616 = vmatprep.mubr.bf16.mxu0 0
        %1617 = vmatmul.mubr.bf16.gmra.mrb[0].mxu0 %v1574
        %v1618 = vpop.f32.mrb[0].mxu0
        %v1619 = vadd.f32 %v1557, %v1618
        %v1620 = vpop.f32.mrb[0].mxu0
        %v1621 = vpop.f32.mrb[0].mxu0
        %v1622 = vadd.f32 %v1557, %v1621
        %v1623 = vpop.f32.mrb[0].mxu0
        %1624 = vdwg.mxu0
        %v1625 = vadd.f32 %v806, %v1611
        %v1626 = vadd.f32 %v807, %v1614
        %v1627 = vadd.f32 %v808, %v1619
        %v1628 = vadd.f32 %v809, %v1622
        %v1629 = vld [vmem:[%s693 + $0x4] sm:$0x1]
        %v1630 = vld [vmem:[%s693 + $0x5] sm:$0x1]
        %v1631 = vsel %vm833, %v1625, 0.0
        %1632 = vadd.xlane.f32.xlu0 %v1631
        %v1633 = vpop.xlane.xlu0 %1632
        %v1634 = vsel %vm833, %v1626, 0.0
        %1635 = vadd.xlane.f32.xlu0 %v1634
        %v1636 = vpop.xlane.xlu0 %1635
        %v1637 = vsel %vm833, %v1627, 0.0
        %1638 = vadd.xlane.f32.xlu0 %v1637
        %v1639 = vpop.xlane.xlu0 %1638
        %v1640 = vsel %vm833, %v1628, 0.0
        %1641 = vadd.xlane.f32.xlu0 %v1640
        %v1642 = vpop.xlane.xlu0 %1641
        %v1643 = vrcp.pop 32.0
        %v1644 = vmul.f32 %v1633, %v1643
        %v1645 = vmul.f32 %v1636, %v1643
        %v1646 = vmul.f32 %v1639, %v1643
        %v1647 = vmul.f32 %v1642, %v1643
        %v1648 = vsub.f32 %v1625, %v1644
        %v1649 = vsub.f32 %v1626, %v1645
        %v1650 = vsub.f32 %v1627, %v1646
        %v1651 = vsub.f32 %v1628, %v1647
        %v1652 = vmul.f32 %v1648, %v1648
        %v1653 = vmul.f32 %v1649, %v1649
        %v1654 = vmul.f32 %v1650, %v1650
        %v1655 = vmul.f32 %v1651, %v1651
        %v1656 = vsel %vm833, %v1652, 0.0
        %1657 = vadd.xlane.f32.xlu0 %v1656
        %v1658 = vpop.xlane.xlu0 %1657
        %v1659 = vsel %vm833, %v1653, 0.0
        %1660 = vadd.xlane.f32.xlu0 %v1659
        %v1661 = vpop.xlane.xlu0 %1660
        %v1662 = vsel %vm833, %v1654, 0.0
        %1663 = vadd.xlane.f32.xlu0 %v1662
        %v1664 = vpop.xlane.xlu0 %1663
        %v1665 = vsel %vm833, %v1655, 0.0
        %1666 = vadd.xlane.f32.xlu0 %v1665
        %v1667 = vpop.xlane.xlu0 %1666
        %v1668 = vmul.f32 %v1658, %v1643
        %v1669 = vmul.f32 %v1661, %v1643
        %v1670 = vmul.f32 %v1664, %v1643
        %v1671 = vmul.f32 %v1667, %v1643
        %v1672 = vadd.f32 %v1668, 1e-12
        %v1673 = vadd.f32 %v1669, 1e-12
        %v1674 = vadd.f32 %v1670, 1e-12
        %v1675 = vadd.f32 %v1671, 1e-12
        %v1676 = vrsqrt.pop %v1672
        %v1677 = vrsqrt.pop %v1673
        %v1678 = vrsqrt.pop %v1674
        %v1679 = vrsqrt.pop %v1675
        %v1680 = vmul.f32 %v1648, %v1676
        %v1681 = vmul.f32 %v1649, %v1677
        %v1682 = vmul.f32 %v1650, %v1678
        %v1683 = vmul.f32 %v1651, %v1679
        %v1684 = vlaneseq
        %v1685 = vshrl.u32 %v1684, 7
        %v1686 = vsub.s32 0, %v1685
        %v1687 = vrot.slane %v1629, %v1686
        %v1688 = vmul.f32 %v1680, %v1687
        %v1689 = vmul.f32 %v1681, %v1687
        %v1690 = vmul.f32 %v1682, %v1687
        %v1691 = vmul.f32 %v1683, %v1687
        %v1692 = vlaneseq
        %v1693 = vshrl.u32 %v1692, 7
        %v1694 = vsub.s32 0, %v1693
        %v1695 = vrot.slane %v1630, %v1694
        %v1696 = vadd.f32 %v1688, %v1695
        %v1697 = vadd.f32 %v1689, %v1695
        %v1698 = vadd.f32 %v1690, %v1695
        %v1699 = vadd.f32 %v1691, %v1695
        %v1700 = vpack.c.bf16 %v1697, %v1696
        %v1701 = vpack.c.bf16 %v1699, %v1698
        %v1702 = vld [vmem:[%s589] sm:$0xf]
        %v1703 = vld [vmem:[%s589 + $0x4] sm:$0xf]
        %v1704 = vld [vmem:[%s589 + $0x8] sm:$0xf]
        %v1705 = vld [vmem:[%s589 + $0xc] sm:$0xf]
        %v1706 = vld [vmem:[%s696] sm:$0x1]
        %v1708 = vlaneseq
        %v1709 = vshrl.u32 %v1708, 7
        %v1710 = vsub.s32 0, %v1709
        %v1711 = vrot.slane %v1706, %v1710
        %v1717 = vunpack.c.l.b16 %v1702
        %v1718 = vunpack.c.l.b16 %v1703
        %v1719 = vunpack.c.l.b16 %v1704
        %v1720 = vunpack.c.l.b16 %v1705
        %v1721 = vpack.c.b16 %v1718, %v1717
        %v1722 = vpack.c.b16 %v1720, %v1719
        %v1726 = vsel %vm833, %v1700, 0
        %v1729 = vsel %vm833, %v1701, 0
        %1731 = vmatprep.subr.bf16.mxu0 0
        %1732 = vmatpush1.bf16.msra.mxu0 %v1721
        %1733 = vmatprep.subr.bf16.mxu0 0
        %1734 = vmatpush1.bf16.msra.mxu0 %v1722
        %1735 = vmatprep.subr.bf16.mxu0 0
        %1736 = vmatpush1.bf16.msra.mxu0 0
        %1737 = vmatprep.subr.bf16.mxu0 0
        %1738 = vmatpush1.bf16.msra.mxu0 0
        %1739 = vmatprep.subr.bf16.mxu0 0
        %1740 = vmatpush1.bf16.msra.mxu0 0
        %1741 = vmatprep.subr.bf16.mxu0 0
        %1742 = vmatpush1.bf16.msra.mxu0 0
        %1743 = vmatprep.subr.bf16.mxu0 0
        %1744 = vmatpush1.bf16.msra.mxu0 0
        %1745 = vmatprep.subr.bf16.mxu0 0
        %1746 = vmatpush1.bf16.msra.mxu0 0
        %1747 = vmatprep.subr.bf16.mxu0 0
        %1748 = vmatpush1.bf16.msra.mxu0 0
        %1749 = vmatprep.subr.bf16.mxu0 0
        %1750 = vmatpush1.bf16.msra.mxu0 0
        %1751 = vmatprep.subr.bf16.mxu0 0
        %1752 = vmatpush1.bf16.msra.mxu0 0
        %1753 = vmatprep.subr.bf16.mxu0 0
        %1754 = vmatpush1.bf16.msra.mxu0 0
        %1755 = vmatprep.subr.bf16.mxu0 0
        %1756 = vmatpush1.bf16.msra.mxu0 0
        %1757 = vmatprep.subr.bf16.mxu0 0
        %1758 = vmatpush1.bf16.msra.mxu0 0
        %1759 = vmatprep.subr.bf16.mxu0 0
        %1760 = vmatpush1.bf16.msra.mxu0 0
        %1761 = vmatprep.subr.bf16.mxu0 0
        %1762 = vmatpush1.bf16.msra.mxu0 0
        %1763 = vmatprep.mubr.bf16.mxu0 0
        %1764 = vmatmul.mubr.bf16.gmra.mrb[0].mxu0 %v1726
        %v1765 = vpop.f32.mrb[0].mxu0
        %v1766 = vadd.f32 %v1711, %v1765
        %v1767 = vpop.f32.mrb[0].mxu0
        %v1768 = vpop.f32.mrb[0].mxu0
        %v1769 = vadd.f32 %v1711, %v1768
        %v1770 = vpop.f32.mrb[0].mxu0
        %1771 = vmatprep.mubr.bf16.mxu0 0
        %1772 = vmatmul.mubr.bf16.gmra.mrb[0].mxu0 %v1729
        %v1773 = vpop.f32.mrb[0].mxu0
        %v1774 = vadd.f32 %v1711, %v1773
        %v1775 = vpop.f32.mrb[0].mxu0
        %v1776 = vpop.f32.mrb[0].mxu0
        %v1777 = vadd.f32 %v1711, %v1776
        %v1778 = vpop.f32.mrb[0].mxu0
        %1779 = vdwg.mxu0
        %v1780 = vmul.f32 %v1766, %v1766
        %v1781 = vmul.f32 %v1769, %v1769
        %v1782 = vmul.f32 %v1774, %v1774
        %v1783 = vmul.f32 %v1777, %v1777
        %v1784 = vmul.f32 %v1766, %v1780
        %v1785 = vmul.f32 %v1769, %v1781
        %v1786 = vmul.f32 %v1774, %v1782
        %v1787 = vmul.f32 %v1777, %v1783
        %v1788 = vmul.f32 %v1784, 0.044715
        %v1789 = vmul.f32 %v1785, 0.044715
        %v1790 = vmul.f32 %v1786, 0.044715
        %v1791 = vmul.f32 %v1787, 0.044715
        %v1792 = vadd.f32 %v1766, %v1788
        %v1793 = vadd.f32 %v1769, %v1789
        %v1794 = vadd.f32 %v1774, %v1790
        %v1795 = vadd.f32 %v1777, %v1791
        %v1796 = vmul.f32 %v1792, 0.7978846
        %v1797 = vmul.f32 %v1793, 0.7978846
        %v1798 = vmul.f32 %v1794, 0.7978846
        %v1799 = vmul.f32 %v1795, 0.7978846
        %v1800 = vtanh.pop %v1796
        %v1801 = vtanh.pop %v1797
        %v1802 = vtanh.pop %v1798
        %v1803 = vtanh.pop %v1799
        %v1804 = vadd.f32 %v1800, 1.0
        %v1805 = vadd.f32 %v1801, 1.0
        %v1806 = vadd.f32 %v1802, 1.0
        %v1807 = vadd.f32 %v1803, 1.0
        %v1808 = vmul.f32 %v1804, 0.5
        %v1809 = vmul.f32 %v1805, 0.5
        %v1810 = vmul.f32 %v1806, 0.5
        %v1811 = vmul.f32 %v1807, 0.5
        %v1812 = vmul.f32 %v1766, %v1808
        %v1813 = vmul.f32 %v1769, %v1809
        %v1814 = vmul.f32 %v1774, %v1810
        %v1815 = vmul.f32 %v1777, %v1811
        %v1816 = vpack.c.bf16 %v1813, %v1812
        %v1817 = vpack.c.bf16 %v1815, %v1814
        %v1818 = vld [vmem:[%s688] sm:$0xf]
        %v1819 = vld [vmem:[%s688 + $0x4] sm:$0xf]
        %v1820 = vld [vmem:[%s688 + $0x8] sm:$0xf]
        %v1821 = vld [vmem:[%s688 + $0xc] sm:$0xf]
        %v1822 = vld [vmem:[%s688 + $0x10] sm:$0xf]
        %v1823 = vld [vmem:[%s688 + $0x14] sm:$0xf]
        %v1824 = vld [vmem:[%s688 + $0x18] sm:$0xf]
        %v1825 = vld [vmem:[%s688 + $0x1c] sm:$0xf]
        %v1826 = vld [vmem:[%s693 + $0x6] sm:$0x1]
        %v1827 = vlaneseq
        %v1828 = vshrl.u32 %v1827, 7
        %v1829 = vsub.s32 0, %v1828
        %v1830 = vrot.slane %v1826, %v1829
        %v1839 = vunpack.c.l.b16 %v1818
        %v1840 = vunpack.c.l.b16 %v1819
        %v1841 = vunpack.c.l.b16 %v1820
        %v1842 = vunpack.c.l.b16 %v1821
        %v1843 = vunpack.c.l.b16 %v1822
        %v1844 = vunpack.c.l.b16 %v1823
        %v1845 = vunpack.c.l.b16 %v1824
        %v1846 = vunpack.c.l.b16 %v1825
        %v1847 = vpack.c.b16 %v1840, %v1839
        %v1848 = vpack.c.b16 %v1842, %v1841
        %v1849 = vpack.c.b16 %v1844, %v1843
        %v1850 = vpack.c.b16 %v1846, %v1845
        %vm1855 = vcmask 523264
        %v1857 = vsel %vm1855, %v1816, 0
        %v1860 = vsel %vm1855, %v1817, 0
        %1862 = vmatprep.subr.bf16.mxu0 0
        %1863 = vmatpush1.bf16.msra.mxu0 %v1847
        %1864 = vmatprep.subr.bf16.mxu0 0
        %1865 = vmatpush1.bf16.msra.mxu0 %v1848
        %1866 = vmatprep.subr.bf16.mxu0 0
        %1867 = vmatpush1.bf16.msra.mxu0 %v1849
        %1868 = vmatprep.subr.bf16.mxu0 0
        %1869 = vmatpush1.bf16.msra.mxu0 %v1850
        %1870 = vmatprep.subr.bf16.mxu0 0
        %1871 = vmatpush1.bf16.msra.mxu0 0
        %1872 = vmatprep.subr.bf16.mxu0 0
        %1873 = vmatpush1.bf16.msra.mxu0 0
        %1874 = vmatprep.subr.bf16.mxu0 0
        %1875 = vmatpush1.bf16.msra.mxu0 0
        %1876 = vmatprep.subr.bf16.mxu0 0
        %1877 = vmatpush1.bf16.msra.mxu0 0
        %1878 = vmatprep.subr.bf16.mxu0 0
        %1879 = vmatpush1.bf16.msra.mxu0 0
        %1880 = vmatprep.subr.bf16.mxu0 0
        %1881 = vmatpush1.bf16.msra.mxu0 0
        %1882 = vmatprep.subr.bf16.mxu0 0
        %1883 = vmatpush1.bf16.msra.mxu0 0
        %1884 = vmatprep.subr.bf16.mxu0 0
        %1885 = vmatpush1.bf16.msra.mxu0 0
        %1886 = vmatprep.subr.bf16.mxu0 0
        %1887 = vmatpush1.bf16.msra.mxu0 0
        %1888 = vmatprep.subr.bf16.mxu0 0
        %1889 = vmatpush1.bf16.msra.mxu0 0
        %1890 = vmatprep.subr.bf16.mxu0 0
        %1891 = vmatpush1.bf16.msra.mxu0 0
        %1892 = vmatprep.subr.bf16.mxu0 0
        %1893 = vmatpush1.bf16.msra.mxu0 0
        %1894 = vmatprep.mubr.bf16.mxu0 0
        %1895 = vmatmul.mubr.bf16.gmra.mrb[0].mxu0 %v1857
        %v1896 = vpop.f32.mrb[0].mxu0
        %v1897 = vadd.f32 %v1830, %v1896
        %v1898 = vpop.f32.mrb[0].mxu0
        %v1899 = vpop.f32.mrb[0].mxu0
        %v1900 = vadd.f32 %v1830, %v1899
        %v1901 = vpop.f32.mrb[0].mxu0
        %1902 = vmatprep.mubr.bf16.mxu0 0
        %1903 = vmatmul.mubr.bf16.gmra.mrb[0].mxu0 %v1860
        %v1904 = vpop.f32.mrb[0].mxu0
        %v1905 = vadd.f32 %v1830, %v1904
        %v1906 = vpop.f32.mrb[0].mxu0
        %v1907 = vpop.f32.mrb[0].mxu0
        %v1908 = vadd.f32 %v1830, %v1907
        %v1909 = vpop.f32.mrb[0].mxu0
        %1910 = vdwg.mxu0
        %v1911 = vadd.f32 %v1696, %v1897
        %v1912 = vadd.f32 %v1697, %v1900
        %v1913 = vadd.f32 %v1698, %v1905
        %v1914 = vadd.f32 %v1699, %v1908
        %v1915 = vld [vmem:[%s693 + $0x7] sm:$0x1]
        %v1916 = vld [vmem:[%s693 + $0x8] sm:$0x1]
        %v1917 = vsel %vm833, %v1911, 0.0
        %1918 = vadd.xlane.f32.xlu0 %v1917
        %v1919 = vpop.xlane.xlu0 %1918
        %v1920 = vsel %vm833, %v1912, 0.0
        %1921 = vadd.xlane.f32.xlu0 %v1920
        %v1922 = vpop.xlane.xlu0 %1921
        %v1923 = vsel %vm833, %v1913, 0.0
        %1924 = vadd.xlane.f32.xlu0 %v1923
        %v1925 = vpop.xlane.xlu0 %1924
        %v1926 = vsel %vm833, %v1914, 0.0
        %1927 = vadd.xlane.f32.xlu0 %v1926
        %v1928 = vpop.xlane.xlu0 %1927
        %v1929 = vmul.f32 %v1919, %v1643
        %v1930 = vmul.f32 %v1922, %v1643
        %v1931 = vmul.f32 %v1925, %v1643
        %v1932 = vmul.f32 %v1928, %v1643
        %v1933 = vsub.f32 %v1911, %v1929
        %v1934 = vsub.f32 %v1912, %v1930
        %v1935 = vsub.f32 %v1913, %v1931
        %v1936 = vsub.f32 %v1914, %v1932
        %v1937 = vmul.f32 %v1933, %v1933
        %v1938 = vmul.f32 %v1934, %v1934
        %v1939 = vmul.f32 %v1935, %v1935
        %v1940 = vmul.f32 %v1936, %v1936
        %v1941 = vsel %vm833, %v1937, 0.0
        %1942 = vadd.xlane.f32.xlu0 %v1941
        %v1943 = vpop.xlane.xlu0 %1942
        %v1944 = vsel %vm833, %v1938, 0.0
        %1945 = vadd.xlane.f32.xlu0 %v1944
        %v1946 = vpop.xlane.xlu0 %1945
        %v1947 = vsel %vm833, %v1939, 0.0
        %1948 = vadd.xlane.f32.xlu0 %v1947
        %v1949 = vpop.xlane.xlu0 %1948
        %v1950 = vsel %vm833, %v1940, 0.0
        %1951 = vadd.xlane.f32.xlu0 %v1950
        %v1952 = vpop.xlane.xlu0 %1951
        %v1953 = vmul.f32 %v1943, %v1643
        %v1954 = vmul.f32 %v1946, %v1643
        %v1955 = vmul.f32 %v1949, %v1643
        %v1956 = vmul.f32 %v1952, %v1643
        %v1957 = vadd.f32 %v1953, 1e-12
        %v1958 = vadd.f32 %v1954, 1e-12
        %v1959 = vadd.f32 %v1955, 1e-12
        %v1960 = vadd.f32 %v1956, 1e-12
        %v1961 = vrsqrt.pop %v1957
        %v1962 = vrsqrt.pop %v1958
        %v1963 = vrsqrt.pop %v1959
        %v1964 = vrsqrt.pop %v1960
        %v1965 = vmul.f32 %v1933, %v1961
        %v1966 = vmul.f32 %v1934, %v1962
        %v1967 = vmul.f32 %v1935, %v1963
        %v1968 = vmul.f32 %v1936, %v1964
        %v1969 = vlaneseq
        %v1970 = vshrl.u32 %v1969, 7
        %v1971 = vsub.s32 0, %v1970
        %v1972 = vrot.slane %v1915, %v1971
        %v1973 = vmul.f32 %v1965, %v1972
        %v1974 = vmul.f32 %v1966, %v1972
        %v1975 = vmul.f32 %v1967, %v1972
        %v1976 = vmul.f32 %v1968, %v1972
        %v1977 = vlaneseq
        %v1978 = vshrl.u32 %v1977, 7
        %v1979 = vsub.s32 0, %v1978
        %v1980 = vrot.slane %v1916, %v1979
        %v1981 = vadd.f32 %v1973, %v1980
        %v1982 = vadd.f32 %v1974, %v1980
        %v1983 = vadd.f32 %v1975, %v1980
        %v1984 = vadd.f32 %v1976, %v1980
        %1985 = vst.msk [vmem:[#allocation2] sm:$0xff] %vm833, %v1981
        %1986 = vst.msk [vmem:[#allocation2 + $0x8] sm:$0xff] %vm833, %v1982
        %1987 = vst.msk [vmem:[#allocation2 + $0x10] sm:$0xff] %vm833, %v1983
        %1988 = vst.msk [vmem:[#allocation2 + $0x18] sm:$0xff] %vm833, %v1984
        %p1989 = scmp.eq.s32.totalorder %s34, 1
        // Predicated region
        $region101: #{tpu_custom_call.1} parent=75 // pred_check
          %p1990 = pneg %p1989
        $region102: #{tpu_custom_call.1} parent=75 // pred_check_branch
          %1992 = sbr.rel (%p1990) target = $region104
        $region103: #{tpu_custom_call.1} parent=75 // pred_region
          %1993 = vst.msk [vmem:[#allocation16] sm:$0xff] %vm833, %v1981
          %1994 = vst.msk [vmem:[#allocation16 + $0x8] sm:$0xff] %vm833, %v1982
          %1995 = vst.msk [vmem:[#allocation16 + $0x10] sm:$0xff] %vm833, %v1983
          %1996 = vst.msk [vmem:[#allocation16 + $0x18] sm:$0xff] %vm833, %v1984
        $region104: #{tpu_custom_call.1} parent=75 // pred_fallthru
          _
        // Predicated region
        $region105: #{tpu_custom_call.1} parent=75 // pred_check
          %p1997 = pneg %p403
        $region106: #{tpu_custom_call.1} parent=75 // pred_check_branch
          %1999 = sbr.rel (%p1997) target = $region108
        $region107: #{tpu_custom_call.1} parent=75 // pred_region
          %s2000 = smul.u32 2, %s33
          %s2002 = ssub.s32 512, 512
          %2003 = vsyncadd [#allocation9], %s2002
          %s2004 = smul.addr %s2000, 2
          %s2005 = smul.addr %s2004, 128
          %s2006 = scalar_lea.hbm %s14, %s2005
          %s2007 = sshll.u32 [#allocation16], 4
          %s2008 = int_to_ptr.vmem [resolvable:$true] %s2007
          %2013 = dma.vmem_to_hbm [thread:$0]  %s2008, 512, %s2006, [#allocation9], 128, 128, 8
        $region108: #{tpu_custom_call.1} parent=75 // pred_fallthru
          _
        // Predicated region
        $region109: #{tpu_custom_call.1} parent=75 // pred_check
          %p2014 = pneg %p403
        $region110: #{tpu_custom_call.1} parent=75 // pred_check_branch
          %2016 = sbr.rel (%p2014) target = $region112
        $region111: #{tpu_custom_call.1} parent=75 // pred_region
          %2017 = dma.done [#allocation9], 512
        $region112: #{tpu_custom_call.1} parent=75 // pred_fallthru
          _
      $region76: #{tpu_custom_call.1} parent=5 // pred_fallthru
        _
      %p2018 = scmp.le.s32.totalorder 2, %s24
      // Predicated region
      $region113: #{tpu_custom_call.1} parent=5 // pred_check
        %p2019 = pneg %p2018
      $region114: #{tpu_custom_call.1} parent=5 // pred_check_branch
        %2021 = sbr.rel (%p2019) target = $region116
      $region115: #{tpu_custom_call.1} parent=5 // pred_region
        %s2022 = ssub.s32 %s24, 2
      $region116: #{tpu_custom_call.1} parent=5 // pred_fallthru
        _
    $region6: #{tpu_custom_call.1} parent=1 // loop_footer
      %s28 = sadd.s32 1, %s24
    $region7: #{tpu_custom_call.1} parent=1 // loop_footer_branch
      %23 = sbr.rel target = $region3
    $region8: #{tpu_custom_call.1} parent=1 // loop_exit
      _
    %2023 = vsyncpa [#allocation8], 1
    %s2024 = scalar_lea.sflag [#allocation8], 1
    %2025 = vsyncpa %s2024, 1
    %2026 = vsyncpa [#allocation11], 1
    %2027 = vsyncpa [#allocation14], 1
    %2028 = vsyncpa [#allocation9], 1
    %s2029 = scalar_lea.sflag [#allocation9], 1
    %2030 = vsyncpa %s2029, 1

</llo_original>
